<compile_context>
chip_gen: v7x
topology: tpu7x:2x2x1
jax: 0.10.0
libtpu: 0.0.40
codegen_flags: <defaults>
</compile_context>

<pallas_src>
import functools

import jax
import jax.numpy as jnp
from jax.experimental import pallas as pl
from jax.experimental.pallas import tpu as pltpu


def _round_up(n, m):
  return ((n + m - 1) // m) * m


# ------------------------------ fused kernel --------------------------------

def _cvae_fused_kernel(
    x_ref, c_ref, eps_ref,
    ew1_ref, eb1_ref, ewmu_ref, ebmu_ref, ewlv_ref, eblv_ref,
    dw1z_ref, dw1c_ref, db1_ref, dw2_ref, db2_ref,
    xhat_ref, stats_ref, z_ref,
    *, K, B_pad, latent, c_dim):
  """Encoder -> reparameterize -> conditioned decoder, all resident in VMEM."""
  # ---- Encoder: x -> ReLU(x W1 + b1) -> (mu, logvar) ------------------------
  h = jnp.dot(x_ref[...], ew1_ref[...], preferred_element_type=jnp.float32)
  h = jnp.maximum(h + eb1_ref[...], 0.0)                     # f32 activations
  h_bf = h.astype(jnp.bfloat16)
  mu = (jnp.dot(h_bf, ewmu_ref[...], preferred_element_type=jnp.float32)
        + ebmu_ref[...])
  logvar = (jnp.dot(h_bf, ewlv_ref[...], preferred_element_type=jnp.float32)
            + eblv_ref[...])
  # Pack mu|logvar into one output instead of two 16-lane-wide outputs.
  stats_ref[:, :latent] = mu
  stats_ref[:, latent:] = logvar

  # ---- Reparameterize: z = mu + exp(0.5*logvar) * eps  (K samples) ----------
  std = jnp.exp(0.5 * logvar)                                # f32 on the EUP
  mu_k = jnp.tile(mu, (K, 1))                                # (K*B_pad, L)
  std_k = jnp.tile(std, (K, 1))
  z = mu_k + std_k * eps_ref[...]
  z_ref[...] = z

  # ---- Conditioning: onehot(c) @ W1_c built in-kernel (c == -1 -> zeros) ----
  lanes = jax.lax.broadcasted_iota(jnp.int32, (K * B_pad, c_dim), 1)
  c_onehot = (lanes == c_ref[...]).astype(jnp.float32).astype(jnp.bfloat16)
  cond = jnp.dot(c_onehot, dw1c_ref[...], preferred_element_type=jnp.float32)

  # ---- Decoder: ReLU(z W1_z + cond + b1) -> sigmoid(h W2 + b2) --------------
  hd = (jnp.dot(z.astype(jnp.bfloat16), dw1z_ref[...],
                preferred_element_type=jnp.float32)
        + cond + db1_ref[...])
  hd = jnp.maximum(hd, 0.0)
  logits = (jnp.dot(hd.astype(jnp.bfloat16), dw2_ref[...],
                    preferred_element_type=jnp.float32)
            + db2_ref[...])
  xhat_ref[...] = jax.nn.sigmoid(logits)                     # f32 on the EUP


_VMEM_SPEC = pl.BlockSpec(memory_space=pltpu.MemorySpace.VMEM)


# ------------------------------ CVAE wrapper --------------------------------

class CVAEPallas:
  """Concrete CVAE: MLP encoder/decoder, Normal posterior, one-hot cond."""

  def __init__(self, *, in_shape=(4, 16, 16), hidden=128, latent=16,
               c_dim=10, c_mask=0.0, seed=0):
    self.in_shape = in_shape
    C, H, W = in_shape
    self.D = C * H * W
    self.hidden = hidden
    self.latent = latent
    self.c_dim = c_dim
    self.c_mask = c_mask

    key = jax.random.PRNGKey(seed)
    ks = jax.random.split(key, 6)

    def init(k, shape, fan_in):
      w = jax.random.normal(k, shape, jnp.float32) * (1.0 / jnp.sqrt(fan_in))
      return w.astype(jnp.bfloat16)                 # bf16 weights (MXU path)

    # Encoder params.
    self.enc_w1 = init(ks[0], (self.D, hidden), self.D)
    self.enc_b1 = jnp.zeros((1, hidden), jnp.float32)
    self.enc_wmu = init(ks[1], (hidden, latent), hidden)
    self.enc_bmu = jnp.zeros((1, latent), jnp.float32)
    self.enc_wlv = init(ks[2], (hidden, latent), hidden)
    self.enc_blv = jnp.zeros((1, latent), jnp.float32)
    # Decoder params. First layer is split: [z | onehot(c)] @ W1  ==
    #   z @ W1_z + onehot(c) @ W1_c   (identical math, no concat / 26-wide K).
    self.dec_w1z = init(ks[3], (latent, hidden), latent + c_dim)
    self.dec_w1c = init(ks[4], (c_dim, hidden), latent + c_dim)
    self.dec_b1 = jnp.zeros((1, hidden), jnp.float32)
    self.dec_w2 = init(ks[5], (hidden, self.D), hidden)
    self.dec_b2 = jnp.zeros((1, self.D), jnp.float32)

  @functools.partial(jax.jit, static_argnums=(0, 4))
  def forward(self, x, c, noise_key, K=1):
    B = x.shape[0]
    B_pad = max(8, _round_up(B, 8))       # full sublane tile -> unmasked rows
    KB = K * B_pad

    # ---- glue: flatten NCHW, pad rows to the sublane tile, build labels ----
    x_flat = x.reshape(B, self.D).astype(jnp.bfloat16)
    x_pad = jnp.zeros((B_pad, self.D), jnp.bfloat16).at[:B].set(x_flat)

    # Noise for Normal(mu, std).rsample(K); padded rows get zero noise.
    eps = jax.random.normal(noise_key, (K, B, self.latent), jnp.float32)
    eps_pad = jnp.zeros((K, B_pad, self.latent), jnp.float32).at[:, :B].set(eps)
    eps_flat = eps_pad.reshape(KB, self.latent)

    # Integer labels; -1 (padded rows / c=None) -> all-zero one-hot in-kernel.
    c_ids = jnp.full((B_pad,), -1, jnp.int32)
    if c is not None:
      c_ids = c_ids.at[:B].set(c.astype(jnp.int32))
      # TODO(synk): c_mask > 0 random label-dropout not implemented
      # (c_mask == 0 by default, matching `params` without 'c_mask').
    c_ids = jnp.tile(c_ids, (K,)).reshape(KB, 1)

    args = (x_pad, c_ids, eps_flat,
            self.enc_w1, self.enc_b1, self.enc_wmu, self.enc_bmu,
            self.enc_wlv, self.enc_blv,
            self.dec_w1z, self.dec_w1c, self.dec_b1,
            self.dec_w2, self.dec_b2)

    # Advisory cost hint for XLA scheduling around the custom call.
    flops = 2 * (B_pad * self.D * self.hidden
                 + 2 * B_pad * self.hidden * self.latent
                 + KB * self.latent * self.hidden
                 + KB * self.c_dim * self.hidden
                 + KB * self.hidden * self.D)
    transcendentals = B_pad * self.latent + KB * self.D
    bytes_accessed = sum(int(a.size) * a.dtype.itemsize for a in args)
    bytes_accessed += 4 * (KB * self.D + B_pad * 2 * self.latent
                           + KB * self.latent)

    kernel = functools.partial(
        _cvae_fused_kernel, K=K, B_pad=B_pad, latent=self.latent,
        c_dim=self.c_dim)

    xhat_flat, stats, z_flat = pl.pallas_call(
        kernel,
        out_shape=(
            jax.ShapeDtypeStruct((KB, self.D), jnp.float32),
            jax.ShapeDtypeStruct((B_pad, 2 * self.latent), jnp.float32),
            jax.ShapeDtypeStruct((KB, self.latent), jnp.float32),
        ),
        in_specs=[_VMEM_SPEC] * len(args),
        out_specs=(_VMEM_SPEC, _VMEM_SPEC, _VMEM_SPEC),
        cost_estimate=pl.CostEstimate(
            flops=flops, transcendentals=transcendentals,
            bytes_accessed=bytes_accessed),
    )(*args)

    # ---- glue: unpad + reshape outputs back to module shapes ----
    mu = stats[:B, :self.latent]
    logvar = stats[:B, self.latent:]
    z = z_flat.reshape(K, B_pad, self.latent)[:, :B]
    x_hat = xhat_flat.reshape(K, B_pad, self.D)[:, :B].reshape(
        K, B, *self.in_shape)
    return x_hat, z, mu, logvar


# ---------------------------------- main -------------------------------------

if __name__ == "__main__":
  key = jax.random.PRNGKey(0)
  kx, kc, knoise = jax.random.split(key, 3)

  B, C, H, W = 2, 4, 16, 16
  K = 1
  model = CVAEPallas(in_shape=(C, H, W), hidden=128, latent=16, c_dim=10,
                     seed=0)

  x = jax.random.normal(kx, (B, C, H, W), jnp.float32)       # NCHW input
  c = jax.random.randint(kc, (B,), 0, model.c_dim)           # class labels

  x_hat, z, mu, logvar = model.forward(x, c, knoise, K)
  jax.block_until_ready((x_hat, z, mu, logvar))

  assert x_hat.shape == (K, B, C, H, W), x_hat.shape
  assert z.shape == (K, B, model.latent), z.shape
  assert mu.shape == (B, model.latent), mu.shape
  assert logvar.shape == (B, model.latent), logvar.shape
  assert bool(jnp.all(jnp.isfinite(x_hat)))
  assert bool(jnp.all((x_hat >= 0.0) & (x_hat <= 1.0)))

  print("KERNEL_OK")
</pallas_src>

<mosaic_0001>
module attributes {stable_mosaic.version = 11 : i64} {
  func.func @_cvae_fused_kernel(%arg0: memref<8x1024xbf16, #tpu.memory_space<vmem>>, %arg1: memref<8x1xi32, #tpu.memory_space<vmem>>, %arg2: memref<8x16xf32, #tpu.memory_space<vmem>>, %arg3: memref<1024x128xbf16, #tpu.memory_space<vmem>>, %arg4: memref<1x128xf32, #tpu.memory_space<vmem>>, %arg5: memref<128x16xbf16, #tpu.memory_space<vmem>>, %arg6: memref<1x16xf32, #tpu.memory_space<vmem>>, %arg7: memref<128x16xbf16, #tpu.memory_space<vmem>>, %arg8: memref<1x16xf32, #tpu.memory_space<vmem>>, %arg9: memref<16x128xbf16, #tpu.memory_space<vmem>>, %arg10: memref<10x128xbf16, #tpu.memory_space<vmem>>, %arg11: memref<1x128xf32, #tpu.memory_space<vmem>>, %arg12: memref<128x1024xbf16, #tpu.memory_space<vmem>>, %arg13: memref<1x1024xf32, #tpu.memory_space<vmem>>, %arg14: memref<8x1024xf32, #tpu.memory_space<vmem>>, %arg15: memref<8x32xf32, #tpu.memory_space<vmem>>, %arg16: memref<8x16xf32, #tpu.memory_space<vmem>>) attributes {dimension_semantics = [], scalar_prefetch = 0 : i64, scratch_operands = 0 : i64, tpu.core_type = #tpu.core_type<tc>} {
    %c0 = arith.constant 0 : index
    %c0_0 = arith.constant 0 : index
    %0 = vector.load %arg0[%c0, %c0_0] : memref<8x1024xbf16, #tpu.memory_space<vmem>>, vector<8x1024xbf16>
    %c0_1 = arith.constant 0 : index
    %c0_2 = arith.constant 0 : index
    %1 = vector.load %arg3[%c0_1, %c0_2] : memref<1024x128xbf16, #tpu.memory_space<vmem>>, vector<1024x128xbf16>
    %cst = arith.constant dense<0.000000e+00> : vector<8x128xf32>
    %2 = tpu.matmul %0, %1, %cst {dimension_numbers = #tpu.dot_dimension_numbers<[1], [0], [0], [1], [0, 0, 1, 1], [], []>} : vector<8x1024xbf16>, vector<1024x128xbf16>, vector<8x128xf32> -> vector<8x128xf32>
    %c0_3 = arith.constant 0 : index
    %c0_4 = arith.constant 0 : index
    %3 = vector.load %arg4[%c0_3, %c0_4] : memref<1x128xf32, #tpu.memory_space<vmem>>, vector<1x128xf32>
    %4 = vector.broadcast %3 : vector<1x128xf32> to vector<8x128xf32>
    %5 = arith.addf %2, %4 : vector<8x128xf32>
    %cst_5 = arith.constant 0.000000e+00 : f32
    %6 = vector.broadcast %cst_5 : f32 to vector<8x128xf32>
    %7 = arith.maximumf %5, %6 : vector<8x128xf32>
    %8 = arith.truncf %7 : vector<8x128xf32> to vector<8x128xbf16>
    %c0_6 = arith.constant 0 : index
    %c0_7 = arith.constant 0 : index
    %9 = vector.load %arg5[%c0_6, %c0_7] : memref<128x16xbf16, #tpu.memory_space<vmem>>, vector<128x16xbf16>
    %cst_8 = arith.constant dense<0.000000e+00> : vector<8x16xf32>
    %10 = tpu.matmul %8, %9, %cst_8 {dimension_numbers = #tpu.dot_dimension_numbers<[1], [0], [0], [1], [0, 0, 1, 1], [], []>} : vector<8x128xbf16>, vector<128x16xbf16>, vector<8x16xf32> -> vector<8x16xf32>
    %c0_9 = arith.constant 0 : index
    %c0_10 = arith.constant 0 : index
    %11 = vector.load %arg6[%c0_9, %c0_10] : memref<1x16xf32, #tpu.memory_space<vmem>>, vector<1x16xf32>
    %12 = vector.broadcast %11 : vector<1x16xf32> to vector<8x16xf32>
    %13 = arith.addf %10, %12 : vector<8x16xf32>
    %c0_11 = arith.constant 0 : index
    %c0_12 = arith.constant 0 : index
    %14 = vector.load %arg7[%c0_11, %c0_12] : memref<128x16xbf16, #tpu.memory_space<vmem>>, vector<128x16xbf16>
    %cst_13 = arith.constant dense<0.000000e+00> : vector<8x16xf32>
    %15 = tpu.matmul %8, %14, %cst_13 {dimension_numbers = #tpu.dot_dimension_numbers<[1], [0], [0], [1], [0, 0, 1, 1], [], []>} : vector<8x128xbf16>, vector<128x16xbf16>, vector<8x16xf32> -> vector<8x16xf32>
    %c0_14 = arith.constant 0 : index
    %c0_15 = arith.constant 0 : index
    %16 = vector.load %arg8[%c0_14, %c0_15] : memref<1x16xf32, #tpu.memory_space<vmem>>, vector<1x16xf32>
    %17 = vector.broadcast %16 : vector<1x16xf32> to vector<8x16xf32>
    %18 = arith.addf %15, %17 : vector<8x16xf32>
    %c0_16 = arith.constant 0 : index
    %c0_17 = arith.constant 0 : index
    %19 = vector.load %arg15[%c0_16, %c0_17] : memref<8x32xf32, #tpu.memory_space<vmem>>, vector<8x16xf32>
    tpu.vector_store %arg15[%c0_16, %c0_17], %13 {strides = array<i32>} : memref<8x32xf32, #tpu.memory_space<vmem>>, vector<8x16xf32>,
    %c0_18 = arith.constant 0 : index
    %c16 = arith.constant 16 : index
    %20 = vector.load %arg15[%c0_18, %c16] : memref<8x32xf32, #tpu.memory_space<vmem>>, vector<8x16xf32>
    tpu.vector_store %arg15[%c0_18, %c16], %18 {strides = array<i32>} : memref<8x32xf32, #tpu.memory_space<vmem>>, vector<8x16xf32>,
    %cst_19 = arith.constant 5.000000e-01 : f32
    %21 = vector.broadcast %cst_19 : f32 to vector<8x16xf32>
    %22 = arith.mulf %21, %18 : vector<8x16xf32>
    %23 = math.exp %22 : vector<8x16xf32>
    %c0_20 = arith.constant 0 : index
    %c0_21 = arith.constant 0 : index
    %24 = vector.load %arg2[%c0_20, %c0_21] : memref<8x16xf32, #tpu.memory_space<vmem>>, vector<8x16xf32>
    %25 = arith.mulf %23, %24 : vector<8x16xf32>
    %26 = arith.addf %13, %25 : vector<8x16xf32>
    %c0_22 = arith.constant 0 : index
    %c0_23 = arith.constant 0 : index
    %27 = vector.load %arg16[%c0_22, %c0_23] : memref<8x16xf32, #tpu.memory_space<vmem>>, vector<8x16xf32>
    tpu.vector_store %arg16[%c0_22, %c0_23], %26 {strides = array<i32>} : memref<8x16xf32, #tpu.memory_space<vmem>>, vector<8x16xf32>,
    %28 = tpu.iota {dimensions = array<i32: 1>} : vector<8x10xi32>
    %c0_24 = arith.constant 0 : index
    %c0_25 = arith.constant 0 : index
    %29 = vector.load %arg1[%c0_24, %c0_25] : memref<8x1xi32, #tpu.memory_space<vmem>>, vector<8x1xi32>
    %30 = vector.broadcast %29 : vector<8x1xi32> to vector<8x10xi32>
    %31 = arith.cmpi eq, %28, %30 : vector<8x10xi32>
    %32 = arith.extui %31 : vector<8x10xi1> to vector<8x10xi32>
    %33 = arith.sitofp %32 : vector<8x10xi32> to vector<8x10xf32>
    %34 = arith.truncf %33 : vector<8x10xf32> to vector<8x10xbf16>
    %c0_26 = arith.constant 0 : index
    %c0_27 = arith.constant 0 : index
    %35 = vector.load %arg10[%c0_26, %c0_27] : memref<10x128xbf16, #tpu.memory_space<vmem>>, vector<10x128xbf16>
    %cst_28 = arith.constant dense<0.000000e+00> : vector<8x128xf32>
    %36 = tpu.matmul %34, %35, %cst_28 {dimension_numbers = #tpu.dot_dimension_numbers<[1], [0], [0], [1], [0, 0, 1, 1], [], []>} : vector<8x10xbf16>, vector<10x128xbf16>, vector<8x128xf32> -> vector<8x128xf32>
    %37 = arith.truncf %26 : vector<8x16xf32> to vector<8x16xbf16>
    %c0_29 = arith.constant 0 : index
    %c0_30 = arith.constant 0 : index
    %38 = vector.load %arg9[%c0_29, %c0_30] : memref<16x128xbf16, #tpu.memory_space<vmem>>, vector<16x128xbf16>
    %cst_31 = arith.constant dense<0.000000e+00> : vector<8x128xf32>
    %39 = tpu.matmul %37, %38, %cst_31 {dimension_numbers = #tpu.dot_dimension_numbers<[1], [0], [0], [1], [0, 0, 1, 1], [], []>} : vector<8x16xbf16>, vector<16x128xbf16>, vector<8x128xf32> -> vector<8x128xf32>
    %40 = arith.addf %39, %36 : vector<8x128xf32>
    %c0_32 = arith.constant 0 : index
    %c0_33 = arith.constant 0 : index
    %41 = vector.load %arg11[%c0_32, %c0_33] : memref<1x128xf32, #tpu.memory_space<vmem>>, vector<1x128xf32>
    %42 = vector.broadcast %41 : vector<1x128xf32> to vector<8x128xf32>
    %43 = arith.addf %40, %42 : vector<8x128xf32>
    %cst_34 = arith.constant 0.000000e+00 : f32
    %44 = vector.broadcast %cst_34 : f32 to vector<8x128xf32>
    %45 = arith.maximumf %43, %44 : vector<8x128xf32>
    %46 = arith.truncf %45 : vector<8x128xf32> to vector<8x128xbf16>
    %c0_35 = arith.constant 0 : index
    %c0_36 = arith.constant 0 : index
    %47 = vector.load %arg12[%c0_35, %c0_36] : memref<128x1024xbf16, #tpu.memory_space<vmem>>, vector<128x1024xbf16>
    %cst_37 = arith.constant dense<0.000000e+00> : vector<8x1024xf32>
    %48 = tpu.matmul %46, %47, %cst_37 {dimension_numbers = #tpu.dot_dimension_numbers<[1], [0], [0], [1], [0, 0, 1, 1], [], []>} : vector<8x128xbf16>, vector<128x1024xbf16>, vector<8x1024xf32> -> vector<8x1024xf32>
    %c0_38 = arith.constant 0 : index
    %c0_39 = arith.constant 0 : index
    %49 = vector.load %arg13[%c0_38, %c0_39] : memref<1x1024xf32, #tpu.memory_space<vmem>>, vector<1x1024xf32>
    %50 = vector.broadcast %49 : vector<1x1024xf32> to vector<8x1024xf32>
    %51 = arith.addf %48, %50 : vector<8x1024xf32>
    %52 = arith.negf %51 : vector<8x1024xf32>
    %53 = math.exp %52 : vector<8x1024xf32>
    %cst_40 = arith.constant 1.000000e+00 : f32
    %54 = vector.broadcast %cst_40 : f32 to vector<8x1024xf32>
    %55 = arith.addf %54, %53 : vector<8x1024xf32>
    %56 = arith.divf %54, %55 : vector<8x1024xf32>
    %c0_41 = arith.constant 0 : index
    %c0_42 = arith.constant 0 : index
    %57 = vector.load %arg14[%c0_41, %c0_42] : memref<8x1024xf32, #tpu.memory_space<vmem>>, vector<8x1024xf32>
    tpu.vector_store %arg14[%c0_41, %c0_42], %56 {strides = array<i32>} : memref<8x1024xf32, #tpu.memory_space<vmem>>, vector<8x1024xf32>,
    return
  }
}

</mosaic_0001>

<llo_original>
// kernel: forward.1
$region0: #{forward.1}
  #allocation0 [shape = 'u32[]', space=smem, size = 0x4, offset = 0x4, fixed_abs, tag = 'smem constant byte address 0x4 - core index']
  #allocation1 [shape = 'u32[144,128]{1,0:T(1,128)}', space=vmem, size = 0x12000, scoped, tag = 'internal scratch']
  %s0 = inlined_call_operand.vmem [shape: bf16[8,1024], index: 0, kind: input, shape index: {}]
  %s1 = inlined_call_operand.vmem [shape: s32[8,1], index: 1, kind: input, shape index: {}]
  %s2 = inlined_call_operand.vmem [shape: f32[8,16], index: 2, kind: input, shape index: {}]
  %s3 = inlined_call_operand.vmem [shape: bf16[1024,128], index: 3, kind: input, shape index: {}]
  %s4 = inlined_call_operand.vmem [shape: f32[1,128], index: 4, kind: input, shape index: {}, may-alias: {4,11}]
  %s5 = inlined_call_operand.vmem [shape: bf16[128,16], index: 5, kind: input, shape index: {}]
  %s6 = inlined_call_operand.vmem [shape: f32[1,16], index: 6, kind: input, shape index: {}, may-alias: {6,8}]
  %s7 = inlined_call_operand.vmem [shape: bf16[128,16], index: 7, kind: input, shape index: {}]
  %s8 = inlined_call_operand.vmem [shape: f32[1,16], index: 8, kind: input, shape index: {}, may-alias: {6,8}]
  %s9 = inlined_call_operand.vmem [shape: bf16[16,128], index: 9, kind: input, shape index: {}]
  %s10 = inlined_call_operand.vmem [shape: bf16[10,128], index: 10, kind: input, shape index: {}]
  %s11 = inlined_call_operand.vmem [shape: f32[1,128], index: 11, kind: input, shape index: {}, may-alias: {4,11}]
  %s12 = inlined_call_operand.vmem [shape: bf16[128,1024], index: 12, kind: input, shape index: {}]
  %s13 = inlined_call_operand.vmem [shape: f32[1,1024], index: 13, kind: input, shape index: {}]
  %s14 = inlined_call_operand.vmem [shape: f32[8,1024], index: 14, kind: output, shape index: {0}]
  %s15 = inlined_call_operand.vmem [shape: f32[8,32], index: 15, kind: output, shape index: {1}]
  %s16 = inlined_call_operand.vmem [shape: f32[8,16], index: 16, kind: output, shape index: {2}]
  %17 = xla_tuple %s14, %s15, %s16
  %s18 = sld [smem:[#allocation0]]
  $region82: #{forward.1} parent=0
    _
  %s20 = ssub.s32 1, %s18
  %s21 = scalar_select 0, %s20, %s18
  // Predicated region
  $region2: #{forward.1} parent=0 // pred_check
    _
  $region3: #{forward.1} parent=0 // pred_check_branch
    %23 = sbr.rel (0) target = $region5
  $region4: #{forward.1} parent=0 // pred_region
    _
  $region5: #{forward.1} parent=0 // pred_fallthru
    _
  // Predicated region
  $region6: #{forward.1} parent=0 // pred_check
    _
  $region7: #{forward.1} parent=0 // pred_check_branch
    %25 = sbr.rel (0) target = $region9
  $region8: #{forward.1} parent=0 // pred_region
    _
  $region9: #{forward.1} parent=0 // pred_fallthru
    _
  // Predicated region
  $region10: #{forward.1} parent=0 // pred_check
    _
  $region11: #{forward.1} parent=0 // pred_check_branch
    %27 = sbr.rel (0) target = $region13
  $region12: #{forward.1} parent=0 // pred_region
    _
  $region13: #{forward.1} parent=0 // pred_fallthru
    _
  // Predicated region
  $region14: #{forward.1} parent=0 // pred_check
    _
  $region15: #{forward.1} parent=0 // pred_check_branch
    %29 = sbr.rel (0) target = $region17
  $region16: #{forward.1} parent=0 // pred_region
    _
  $region17: #{forward.1} parent=0 // pred_fallthru
    _
  // Predicated region
  $region18: #{forward.1} parent=0 // pred_check
    _
  $region19: #{forward.1} parent=0 // pred_check_branch
    %31 = sbr.rel (0) target = $region21
  $region20: #{forward.1} parent=0 // pred_region
    _
  $region21: #{forward.1} parent=0 // pred_fallthru
    _
  // Predicated region
  $region22: #{forward.1} parent=0 // pred_check
    _
  $region23: #{forward.1} parent=0 // pred_check_branch
    %33 = sbr.rel (0) target = $region25
  $region24: #{forward.1} parent=0 // pred_region
    _
  $region25: #{forward.1} parent=0 // pred_fallthru
    _
  // Predicated region
  $region26: #{forward.1} parent=0 // pred_check
    _
  $region27: #{forward.1} parent=0 // pred_check_branch
    %35 = sbr.rel (0) target = $region29
  $region28: #{forward.1} parent=0 // pred_region
    _
  $region29: #{forward.1} parent=0 // pred_fallthru
    _
  // Predicated region
  $region30: #{forward.1} parent=0 // pred_check
    _
  $region31: #{forward.1} parent=0 // pred_check_branch
    %37 = sbr.rel (0) target = $region33
  $region32: #{forward.1} parent=0 // pred_region
    _
  $region33: #{forward.1} parent=0 // pred_fallthru
    _
  // Predicated region
  $region34: #{forward.1} parent=0 // pred_check
    _
  $region35: #{forward.1} parent=0 // pred_check_branch
    %39 = sbr.rel (0) target = $region37
  $region36: #{forward.1} parent=0 // pred_region
    _
  $region37: #{forward.1} parent=0 // pred_fallthru
    _
  // Predicated region
  $region38: #{forward.1} parent=0 // pred_check
    _
  $region39: #{forward.1} parent=0 // pred_check_branch
    %41 = sbr.rel (0) target = $region41
  $region40: #{forward.1} parent=0 // pred_region
    _
  $region41: #{forward.1} parent=0 // pred_fallthru
    _
  // Predicated region
  $region42: #{forward.1} parent=0 // pred_check
    _
  $region43: #{forward.1} parent=0 // pred_check_branch
    %43 = sbr.rel (0) target = $region45
  $region44: #{forward.1} parent=0 // pred_region
    _
  $region45: #{forward.1} parent=0 // pred_fallthru
    _
  // Predicated region
  $region46: #{forward.1} parent=0 // pred_check
    _
  $region47: #{forward.1} parent=0 // pred_check_branch
    %45 = sbr.rel (0) target = $region49
  $region48: #{forward.1} parent=0 // pred_region
    _
  $region49: #{forward.1} parent=0 // pred_fallthru
    _
  // Predicated region
  $region50: #{forward.1} parent=0 // pred_check
    _
  $region51: #{forward.1} parent=0 // pred_check_branch
    %47 = sbr.rel (0) target = $region53
  $region52: #{forward.1} parent=0 // pred_region
    _
  $region53: #{forward.1} parent=0 // pred_fallthru
    _
  // Predicated region
  $region54: #{forward.1} parent=0 // pred_check
    _
  $region55: #{forward.1} parent=0 // pred_check_branch
    %49 = sbr.rel (0) target = $region57
  $region56: #{forward.1} parent=0 // pred_region
    _
  $region57: #{forward.1} parent=0 // pred_fallthru
    _
  %v51 = vld [vmem:[%s0] sm:$0xff]
  %v52 = vld [vmem:[%s0 + $0x8] sm:$0xff]
  %v53 = vld [vmem:[%s0 + $0x10] sm:$0xff]
  %v54 = vld [vmem:[%s0 + $0x18] sm:$0xff]
  %v55 = vld [vmem:[%s3] sm:$0xf]
  %v56 = vld [vmem:[%s3 + $0x4] sm:$0xf]
  %v57 = vld [vmem:[%s3 + $0x8] sm:$0xf]
  %v58 = vld [vmem:[%s3 + $0xc] sm:$0xf]
  %v59 = vld [vmem:[%s3 + $0x10] sm:$0xf]
  %v60 = vld [vmem:[%s3 + $0x14] sm:$0xf]
  %v61 = vld [vmem:[%s3 + $0x18] sm:$0xf]
  %v62 = vld [vmem:[%s3 + $0x1c] sm:$0xf]
  %v63 = vld [vmem:[%s3 + $0x20] sm:$0xf]
  %v64 = vld [vmem:[%s3 + $0x24] sm:$0xf]
  %v65 = vld [vmem:[%s3 + $0x28] sm:$0xf]
  %v66 = vld [vmem:[%s3 + $0x2c] sm:$0xf]
  %v67 = vld [vmem:[%s3 + $0x30] sm:$0xf]
  %v68 = vld [vmem:[%s3 + $0x34] sm:$0xf]
  %v69 = vld [vmem:[%s3 + $0x38] sm:$0xf]
  %v70 = vld [vmem:[%s3 + $0x3c] sm:$0xf]
  %v71 = vld [vmem:[%s3 + $0x40] sm:$0xf]
  %v72 = vld [vmem:[%s3 + $0x44] sm:$0xf]
  %v73 = vld [vmem:[%s3 + $0x48] sm:$0xf]
  %v74 = vld [vmem:[%s3 + $0x4c] sm:$0xf]
  %v75 = vld [vmem:[%s3 + $0x50] sm:$0xf]
  %v76 = vld [vmem:[%s3 + $0x54] sm:$0xf]
  %v77 = vld [vmem:[%s3 + $0x58] sm:$0xf]
  %v78 = vld [vmem:[%s3 + $0x5c] sm:$0xf]
  %v79 = vld [vmem:[%s3 + $0x60] sm:$0xf]
  %v80 = vld [vmem:[%s3 + $0x64] sm:$0xf]
  %v81 = vld [vmem:[%s3 + $0x68] sm:$0xf]
  %v82 = vld [vmem:[%s3 + $0x6c] sm:$0xf]
  %v83 = vld [vmem:[%s3 + $0x70] sm:$0xf]
  %v84 = vld [vmem:[%s3 + $0x74] sm:$0xf]
  %v85 = vld [vmem:[%s3 + $0x78] sm:$0xf]
  %v86 = vld [vmem:[%s3 + $0x7c] sm:$0xf]
  %v87 = vld [vmem:[%s3 + $0x80] sm:$0xf]
  %v88 = vld [vmem:[%s3 + $0x84] sm:$0xf]
  %v89 = vld [vmem:[%s3 + $0x88] sm:$0xf]
  %v90 = vld [vmem:[%s3 + $0x8c] sm:$0xf]
  %v91 = vld [vmem:[%s3 + $0x90] sm:$0xf]
  %v92 = vld [vmem:[%s3 + $0x94] sm:$0xf]
  %v93 = vld [vmem:[%s3 + $0x98] sm:$0xf]
  %v94 = vld [vmem:[%s3 + $0x9c] sm:$0xf]
  %v95 = vld [vmem:[%s3 + $0xa0] sm:$0xf]
  %v96 = vld [vmem:[%s3 + $0xa4] sm:$0xf]
  %v97 = vld [vmem:[%s3 + $0xa8] sm:$0xf]
  %v98 = vld [vmem:[%s3 + $0xac] sm:$0xf]
  %v99 = vld [vmem:[%s3 + $0xb0] sm:$0xf]
  %v100 = vld [vmem:[%s3 + $0xb4] sm:$0xf]
  %v101 = vld [vmem:[%s3 + $0xb8] sm:$0xf]
  %v102 = vld [vmem:[%s3 + $0xbc] sm:$0xf]
  %v103 = vld [vmem:[%s3 + $0xc0] sm:$0xf]
  %v104 = vld [vmem:[%s3 + $0xc4] sm:$0xf]
  %v105 = vld [vmem:[%s3 + $0xc8] sm:$0xf]
  %v106 = vld [vmem:[%s3 + $0xcc] sm:$0xf]
  %v107 = vld [vmem:[%s3 + $0xd0] sm:$0xf]
  %v108 = vld [vmem:[%s3 + $0xd4] sm:$0xf]
  %v109 = vld [vmem:[%s3 + $0xd8] sm:$0xf]
  %v110 = vld [vmem:[%s3 + $0xdc] sm:$0xf]
  %v111 = vld [vmem:[%s3 + $0xe0] sm:$0xf]
  %v112 = vld [vmem:[%s3 + $0xe4] sm:$0xf]
  %v113 = vld [vmem:[%s3 + $0xe8] sm:$0xf]
  %v114 = vld [vmem:[%s3 + $0xec] sm:$0xf]
  %v115 = vld [vmem:[%s3 + $0xf0] sm:$0xf]
  %v116 = vld [vmem:[%s3 + $0xf4] sm:$0xf]
  %v117 = vld [vmem:[%s3 + $0xf8] sm:$0xf]
  %v118 = vld [vmem:[%s3 + $0xfc] sm:$0xf]
  %v119 = vld [vmem:[%s3 + $0x100] sm:$0xf]
  %v120 = vld [vmem:[%s3 + $0x104] sm:$0xf]
  %v121 = vld [vmem:[%s3 + $0x108] sm:$0xf]
  %v122 = vld [vmem:[%s3 + $0x10c] sm:$0xf]
  %v123 = vld [vmem:[%s3 + $0x110] sm:$0xf]
  %v124 = vld [vmem:[%s3 + $0x114] sm:$0xf]
  %v125 = vld [vmem:[%s3 + $0x118] sm:$0xf]
  %v126 = vld [vmem:[%s3 + $0x11c] sm:$0xf]
  %v127 = vld [vmem:[%s3 + $0x120] sm:$0xf]
  %v128 = vld [vmem:[%s3 + $0x124] sm:$0xf]
  %v129 = vld [vmem:[%s3 + $0x128] sm:$0xf]
  %v130 = vld [vmem:[%s3 + $0x12c] sm:$0xf]
  %v131 = vld [vmem:[%s3 + $0x130] sm:$0xf]
  %v132 = vld [vmem:[%s3 + $0x134] sm:$0xf]
  %v133 = vld [vmem:[%s3 + $0x138] sm:$0xf]
  %v134 = vld [vmem:[%s3 + $0x13c] sm:$0xf]
  %v135 = vld [vmem:[%s3 + $0x140] sm:$0xf]
  %v136 = vld [vmem:[%s3 + $0x144] sm:$0xf]
  %v137 = vld [vmem:[%s3 + $0x148] sm:$0xf]
  %v138 = vld [vmem:[%s3 + $0x14c] sm:$0xf]
  %v139 = vld [vmem:[%s3 + $0x150] sm:$0xf]
  %v140 = vld [vmem:[%s3 + $0x154] sm:$0xf]
  %v141 = vld [vmem:[%s3 + $0x158] sm:$0xf]
  %v142 = vld [vmem:[%s3 + $0x15c] sm:$0xf]
  %v143 = vld [vmem:[%s3 + $0x160] sm:$0xf]
  %v144 = vld [vmem:[%s3 + $0x164] sm:$0xf]
  %v145 = vld [vmem:[%s3 + $0x168] sm:$0xf]
  %v146 = vld [vmem:[%s3 + $0x16c] sm:$0xf]
  %v147 = vld [vmem:[%s3 + $0x170] sm:$0xf]
  %v148 = vld [vmem:[%s3 + $0x174] sm:$0xf]
  %v149 = vld [vmem:[%s3 + $0x178] sm:$0xf]
  %v150 = vld [vmem:[%s3 + $0x17c] sm:$0xf]
  %v151 = vld [vmem:[%s3 + $0x180] sm:$0xf]
  %v152 = vld [vmem:[%s3 + $0x184] sm:$0xf]
  %v153 = vld [vmem:[%s3 + $0x188] sm:$0xf]
  %v154 = vld [vmem:[%s3 + $0x18c] sm:$0xf]
  %v155 = vld [vmem:[%s3 + $0x190] sm:$0xf]
  %v156 = vld [vmem:[%s3 + $0x194] sm:$0xf]
  %v157 = vld [vmem:[%s3 + $0x198] sm:$0xf]
  %v158 = vld [vmem:[%s3 + $0x19c] sm:$0xf]
  %v159 = vld [vmem:[%s3 + $0x1a0] sm:$0xf]
  %v160 = vld [vmem:[%s3 + $0x1a4] sm:$0xf]
  %v161 = vld [vmem:[%s3 + $0x1a8] sm:$0xf]
  %v162 = vld [vmem:[%s3 + $0x1ac] sm:$0xf]
  %v163 = vld [vmem:[%s3 + $0x1b0] sm:$0xf]
  %v164 = vld [vmem:[%s3 + $0x1b4] sm:$0xf]
  %v165 = vld [vmem:[%s3 + $0x1b8] sm:$0xf]
  %v166 = vld [vmem:[%s3 + $0x1bc] sm:$0xf]
  %v167 = vld [vmem:[%s3 + $0x1c0] sm:$0xf]
  %v168 = vld [vmem:[%s3 + $0x1c4] sm:$0xf]
  %v169 = vld [vmem:[%s3 + $0x1c8] sm:$0xf]
  %v170 = vld [vmem:[%s3 + $0x1cc] sm:$0xf]
  %v171 = vld [vmem:[%s3 + $0x1d0] sm:$0xf]
  %v172 = vld [vmem:[%s3 + $0x1d4] sm:$0xf]
  %v173 = vld [vmem:[%s3 + $0x1d8] sm:$0xf]
  %v174 = vld [vmem:[%s3 + $0x1dc] sm:$0xf]
  %v175 = vld [vmem:[%s3 + $0x1e0] sm:$0xf]
  %v176 = vld [vmem:[%s3 + $0x1e4] sm:$0xf]
  %v177 = vld [vmem:[%s3 + $0x1e8] sm:$0xf]
  %v178 = vld [vmem:[%s3 + $0x1ec] sm:$0xf]
  %v179 = vld [vmem:[%s3 + $0x1f0] sm:$0xf]
  %v180 = vld [vmem:[%s3 + $0x1f4] sm:$0xf]
  %v181 = vld [vmem:[%s3 + $0x1f8] sm:$0xf]
  %v182 = vld [vmem:[%s3 + $0x1fc] sm:$0xf]
  %v183 = vld [vmem:[%s4] sm:$0x1]
  %v185 = vlaneseq
  %v186 = vshrl.u32 %v185, 7
  %v187 = vsub.s32 0, %v186
  %v188 = vrot.slane %v183, %v187
  %v194 = vunpack.c.l.b16 %v51
  %v195 = vunpack.c.h.b16 %v51
  %v196 = vunpack.c.l.b16 %v52
  %v197 = vunpack.c.h.b16 %v52
  %v198 = vunpack.c.l.b16 %v53
  %v199 = vunpack.c.h.b16 %v53
  %v200 = vunpack.c.l.b16 %v54
  %v201 = vunpack.c.h.b16 %v54
  %v202 = vpack.c.b16 %v194, %v194
  %v203 = vpack.c.b16 %v195, %v195
  %v204 = vpack.c.b16 %v196, %v196
  %v205 = vpack.c.b16 %v197, %v197
  %v206 = vpack.c.b16 %v198, %v198
  %v207 = vpack.c.b16 %v199, %v199
  %v208 = vpack.c.b16 %v200, %v200
  %v209 = vpack.c.b16 %v201, %v201
  %v346 = vunpack.c.l.b16 %v55
  %v347 = vunpack.c.l.b16 %v56
  %v348 = vunpack.c.l.b16 %v57
  %v349 = vunpack.c.l.b16 %v58
  %v350 = vunpack.c.l.b16 %v59
  %v351 = vunpack.c.l.b16 %v60
  %v352 = vunpack.c.l.b16 %v61
  %v353 = vunpack.c.l.b16 %v62
  %v354 = vunpack.c.l.b16 %v63
  %v355 = vunpack.c.l.b16 %v64
  %v356 = vunpack.c.l.b16 %v65
  %v357 = vunpack.c.l.b16 %v66
  %v358 = vunpack.c.l.b16 %v67
  %v359 = vunpack.c.l.b16 %v68
  %v360 = vunpack.c.l.b16 %v69
  %v361 = vunpack.c.l.b16 %v70
  %v362 = vunpack.c.l.b16 %v71
  %v363 = vunpack.c.l.b16 %v72
  %v364 = vunpack.c.l.b16 %v73
  %v365 = vunpack.c.l.b16 %v74
  %v366 = vunpack.c.l.b16 %v75
  %v367 = vunpack.c.l.b16 %v76
  %v368 = vunpack.c.l.b16 %v77
  %v369 = vunpack.c.l.b16 %v78
  %v370 = vunpack.c.l.b16 %v79
  %v371 = vunpack.c.l.b16 %v80
  %v372 = vunpack.c.l.b16 %v81
  %v373 = vunpack.c.l.b16 %v82
  %v374 = vunpack.c.l.b16 %v83
  %v375 = vunpack.c.l.b16 %v84
  %v376 = vunpack.c.l.b16 %v85
  %v377 = vunpack.c.l.b16 %v86
  %v378 = vunpack.c.l.b16 %v87
  %v379 = vunpack.c.l.b16 %v88
  %v380 = vunpack.c.l.b16 %v89
  %v381 = vunpack.c.l.b16 %v90
  %v382 = vunpack.c.l.b16 %v91
  %v383 = vunpack.c.l.b16 %v92
  %v384 = vunpack.c.l.b16 %v93
  %v385 = vunpack.c.l.b16 %v94
  %v386 = vunpack.c.l.b16 %v95
  %v387 = vunpack.c.l.b16 %v96
  %v388 = vunpack.c.l.b16 %v97
  %v389 = vunpack.c.l.b16 %v98
  %v390 = vunpack.c.l.b16 %v99
  %v391 = vunpack.c.l.b16 %v100
  %v392 = vunpack.c.l.b16 %v101
  %v393 = vunpack.c.l.b16 %v102
  %v394 = vunpack.c.l.b16 %v103
  %v395 = vunpack.c.l.b16 %v104
  %v396 = vunpack.c.l.b16 %v105
  %v397 = vunpack.c.l.b16 %v106
  %v398 = vunpack.c.l.b16 %v107
  %v399 = vunpack.c.l.b16 %v108
  %v400 = vunpack.c.l.b16 %v109
  %v401 = vunpack.c.l.b16 %v110
  %v402 = vunpack.c.l.b16 %v111
  %v403 = vunpack.c.l.b16 %v112
  %v404 = vunpack.c.l.b16 %v113
  %v405 = vunpack.c.l.b16 %v114
  %v406 = vunpack.c.l.b16 %v115
  %v407 = vunpack.c.l.b16 %v116
  %v408 = vunpack.c.l.b16 %v117
  %v409 = vunpack.c.l.b16 %v118
  %v410 = vunpack.c.l.b16 %v119
  %v411 = vunpack.c.l.b16 %v120
  %v412 = vunpack.c.l.b16 %v121
  %v413 = vunpack.c.l.b16 %v122
  %v414 = vunpack.c.l.b16 %v123
  %v415 = vunpack.c.l.b16 %v124
  %v416 = vunpack.c.l.b16 %v125
  %v417 = vunpack.c.l.b16 %v126
  %v418 = vunpack.c.l.b16 %v127
  %v419 = vunpack.c.l.b16 %v128
  %v420 = vunpack.c.l.b16 %v129
  %v421 = vunpack.c.l.b16 %v130
  %v422 = vunpack.c.l.b16 %v131
  %v423 = vunpack.c.l.b16 %v132
  %v424 = vunpack.c.l.b16 %v133
  %v425 = vunpack.c.l.b16 %v134
  %v426 = vunpack.c.l.b16 %v135
  %v427 = vunpack.c.l.b16 %v136
  %v428 = vunpack.c.l.b16 %v137
  %v429 = vunpack.c.l.b16 %v138
  %v430 = vunpack.c.l.b16 %v139
  %v431 = vunpack.c.l.b16 %v140
  %v432 = vunpack.c.l.b16 %v141
  %v433 = vunpack.c.l.b16 %v142
  %v434 = vunpack.c.l.b16 %v143
  %v435 = vunpack.c.l.b16 %v144
  %v436 = vunpack.c.l.b16 %v145
  %v437 = vunpack.c.l.b16 %v146
  %v438 = vunpack.c.l.b16 %v147
  %v439 = vunpack.c.l.b16 %v148
  %v440 = vunpack.c.l.b16 %v149
  %v441 = vunpack.c.l.b16 %v150
  %v442 = vunpack.c.l.b16 %v151
  %v443 = vunpack.c.l.b16 %v152
  %v444 = vunpack.c.l.b16 %v153
  %v445 = vunpack.c.l.b16 %v154
  %v446 = vunpack.c.l.b16 %v155
  %v447 = vunpack.c.l.b16 %v156
  %v448 = vunpack.c.l.b16 %v157
  %v449 = vunpack.c.l.b16 %v158
  %v450 = vunpack.c.l.b16 %v159
  %v451 = vunpack.c.l.b16 %v160
  %v452 = vunpack.c.l.b16 %v161
  %v453 = vunpack.c.l.b16 %v162
  %v454 = vunpack.c.l.b16 %v163
  %v455 = vunpack.c.l.b16 %v164
  %v456 = vunpack.c.l.b16 %v165
  %v457 = vunpack.c.l.b16 %v166
  %v458 = vunpack.c.l.b16 %v167
  %v459 = vunpack.c.l.b16 %v168
  %v460 = vunpack.c.l.b16 %v169
  %v461 = vunpack.c.l.b16 %v170
  %v462 = vunpack.c.l.b16 %v171
  %v463 = vunpack.c.l.b16 %v172
  %v464 = vunpack.c.l.b16 %v173
  %v465 = vunpack.c.l.b16 %v174
  %v466 = vunpack.c.l.b16 %v175
  %v467 = vunpack.c.l.b16 %v176
  %v468 = vunpack.c.l.b16 %v177
  %v469 = vunpack.c.l.b16 %v178
  %v470 = vunpack.c.l.b16 %v179
  %v471 = vunpack.c.l.b16 %v180
  %v472 = vunpack.c.l.b16 %v181
  %v473 = vunpack.c.l.b16 %v182
  %v474 = vpack.c.b16 %v347, %v346
  %v475 = vpack.c.b16 %v349, %v348
  %v476 = vpack.c.b16 %v351, %v350
  %v477 = vpack.c.b16 %v353, %v352
  %v478 = vpack.c.b16 %v355, %v354
  %v479 = vpack.c.b16 %v357, %v356
  %v480 = vpack.c.b16 %v359, %v358
  %v481 = vpack.c.b16 %v361, %v360
  %v482 = vpack.c.b16 %v363, %v362
  %v483 = vpack.c.b16 %v365, %v364
  %v484 = vpack.c.b16 %v367, %v366
  %v485 = vpack.c.b16 %v369, %v368
  %v486 = vpack.c.b16 %v371, %v370
  %v487 = vpack.c.b16 %v373, %v372
  %v488 = vpack.c.b16 %v375, %v374
  %v489 = vpack.c.b16 %v377, %v376
  %v490 = vpack.c.b16 %v379, %v378
  %v491 = vpack.c.b16 %v381, %v380
  %v492 = vpack.c.b16 %v383, %v382
  %v493 = vpack.c.b16 %v385, %v384
  %v494 = vpack.c.b16 %v387, %v386
  %v495 = vpack.c.b16 %v389, %v388
  %v496 = vpack.c.b16 %v391, %v390
  %v497 = vpack.c.b16 %v393, %v392
  %v498 = vpack.c.b16 %v395, %v394
  %v499 = vpack.c.b16 %v397, %v396
  %v500 = vpack.c.b16 %v399, %v398
  %v501 = vpack.c.b16 %v401, %v400
  %v502 = vpack.c.b16 %v403, %v402
  %v503 = vpack.c.b16 %v405, %v404
  %v504 = vpack.c.b16 %v407, %v406
  %v505 = vpack.c.b16 %v409, %v408
  %v506 = vpack.c.b16 %v411, %v410
  %v507 = vpack.c.b16 %v413, %v412
  %v508 = vpack.c.b16 %v415, %v414
  %v509 = vpack.c.b16 %v417, %v416
  %v510 = vpack.c.b16 %v419, %v418
  %v511 = vpack.c.b16 %v421, %v420
  %v512 = vpack.c.b16 %v423, %v422
  %v513 = vpack.c.b16 %v425, %v424
  %v514 = vpack.c.b16 %v427, %v426
  %v515 = vpack.c.b16 %v429, %v428
  %v516 = vpack.c.b16 %v431, %v430
  %v517 = vpack.c.b16 %v433, %v432
  %v518 = vpack.c.b16 %v435, %v434
  %v519 = vpack.c.b16 %v437, %v436
  %v520 = vpack.c.b16 %v439, %v438
  %v521 = vpack.c.b16 %v441, %v440
  %v522 = vpack.c.b16 %v443, %v442
  %v523 = vpack.c.b16 %v445, %v444
  %v524 = vpack.c.b16 %v447, %v446
  %v525 = vpack.c.b16 %v449, %v448
  %v526 = vpack.c.b16 %v451, %v450
  %v527 = vpack.c.b16 %v453, %v452
  %v528 = vpack.c.b16 %v455, %v454
  %v529 = vpack.c.b16 %v457, %v456
  %v530 = vpack.c.b16 %v459, %v458
  %v531 = vpack.c.b16 %v461, %v460
  %v532 = vpack.c.b16 %v463, %v462
  %v533 = vpack.c.b16 %v465, %v464
  %v534 = vpack.c.b16 %v467, %v466
  %v535 = vpack.c.b16 %v469, %v468
  %v536 = vpack.c.b16 %v471, %v470
  %v537 = vpack.c.b16 %v473, %v472
  %602 = vmatprep.subr.bf16.mxu0 0
  %603 = vmatpush1.bf16.msra.mxu0 %v474
  %604 = vmatprep.subr.bf16.mxu0 0
  %605 = vmatpush1.bf16.msra.mxu0 %v475
  %606 = vmatprep.subr.bf16.mxu0 0
  %607 = vmatpush1.bf16.msra.mxu0 %v476
  %608 = vmatprep.subr.bf16.mxu0 0
  %609 = vmatpush1.bf16.msra.mxu0 %v477
  %610 = vmatprep.subr.bf16.mxu0 0
  %611 = vmatpush1.bf16.msra.mxu0 %v478
  %612 = vmatprep.subr.bf16.mxu0 0
  %613 = vmatpush1.bf16.msra.mxu0 %v479
  %614 = vmatprep.subr.bf16.mxu0 0
  %615 = vmatpush1.bf16.msra.mxu0 %v480
  %616 = vmatprep.subr.bf16.mxu0 0
  %617 = vmatpush1.bf16.msra.mxu0 %v481
  %618 = vmatprep.subr.bf16.mxu0 0
  %619 = vmatpush1.bf16.msra.mxu0 %v482
  %620 = vmatprep.subr.bf16.mxu0 0
  %621 = vmatpush1.bf16.msra.mxu0 %v483
  %622 = vmatprep.subr.bf16.mxu0 0
  %623 = vmatpush1.bf16.msra.mxu0 %v484
  %624 = vmatprep.subr.bf16.mxu0 0
  %625 = vmatpush1.bf16.msra.mxu0 %v485
  %626 = vmatprep.subr.bf16.mxu0 0
  %627 = vmatpush1.bf16.msra.mxu0 %v486
  %628 = vmatprep.subr.bf16.mxu0 0
  %629 = vmatpush1.bf16.msra.mxu0 %v487
  %630 = vmatprep.subr.bf16.mxu0 0
  %631 = vmatpush1.bf16.msra.mxu0 %v488
  %632 = vmatprep.subr.bf16.mxu0 0
  %633 = vmatpush1.bf16.msra.mxu0 %v489
  %634 = vmatprep.mubr.bf16.mxu0 %v203
  %635 = vmatmul.mubr.bf16.gmra.mrb[0].mxu0 %v202
  %v636 = vpop.f32.mrb[0].mxu0
  %v637 = vadd.f32 %v188, %v636
  %v638 = vpop.f32.mrb[0].mxu0
  %v639 = vpop.f32.mrb[0].mxu0
  %v640 = vpop.f32.mrb[0].mxu0
  %641 = vdwg.mxu0
  %642 = vmatprep.subr.bf16.mxu0 0
  %643 = vmatpush1.bf16.msra.mxu0 %v490
  %644 = vmatprep.subr.bf16.mxu0 0
  %645 = vmatpush1.bf16.msra.mxu0 %v491
  %646 = vmatprep.subr.bf16.mxu0 0
  %647 = vmatpush1.bf16.msra.mxu0 %v492
  %648 = vmatprep.subr.bf16.mxu0 0
  %649 = vmatpush1.bf16.msra.mxu0 %v493
  %650 = vmatprep.subr.bf16.mxu0 0
  %651 = vmatpush1.bf16.msra.mxu0 %v494
  %652 = vmatprep.subr.bf16.mxu0 0
  %653 = vmatpush1.bf16.msra.mxu0 %v495
  %654 = vmatprep.subr.bf16.mxu0 0
  %655 = vmatpush1.bf16.msra.mxu0 %v496
  %656 = vmatprep.subr.bf16.mxu0 0
  %657 = vmatpush1.bf16.msra.mxu0 %v497
  %658 = vmatprep.subr.bf16.mxu0 0
  %659 = vmatpush1.bf16.msra.mxu0 %v498
  %660 = vmatprep.subr.bf16.mxu0 0
  %661 = vmatpush1.bf16.msra.mxu0 %v499
  %662 = vmatprep.subr.bf16.mxu0 0
  %663 = vmatpush1.bf16.msra.mxu0 %v500
  %664 = vmatprep.subr.bf16.mxu0 0
  %665 = vmatpush1.bf16.msra.mxu0 %v501
  %666 = vmatprep.subr.bf16.mxu0 0
  %667 = vmatpush1.bf16.msra.mxu0 %v502
  %668 = vmatprep.subr.bf16.mxu0 0
  %669 = vmatpush1.bf16.msra.mxu0 %v503
  %670 = vmatprep.subr.bf16.mxu0 0
  %671 = vmatpush1.bf16.msra.mxu0 %v504
  %672 = vmatprep.subr.bf16.mxu0 0
  %673 = vmatpush1.bf16.msra.mxu0 %v505
  %674 = vmatprep.mubr.bf16.mxu0 %v205
  %675 = vmatmul.mubr.bf16.gmra.mrb[0].mxu0 %v204
  %v676 = vpop.f32.mrb[0].mxu0
  %v677 = vadd.f32 %v637, %v676
  %v678 = vpop.f32.mrb[0].mxu0
  %v679 = vpop.f32.mrb[0].mxu0
  %v680 = vpop.f32.mrb[0].mxu0
  %681 = vdwg.mxu0
  %682 = vmatprep.subr.bf16.mxu0 0
  %683 = vmatpush1.bf16.msra.mxu0 %v506
  %684 = vmatprep.subr.bf16.mxu0 0
  %685 = vmatpush1.bf16.msra.mxu0 %v507
  %686 = vmatprep.subr.bf16.mxu0 0
  %687 = vmatpush1.bf16.msra.mxu0 %v508
  %688 = vmatprep.subr.bf16.mxu0 0
  %689 = vmatpush1.bf16.msra.mxu0 %v509
  %690 = vmatprep.subr.bf16.mxu0 0
  %691 = vmatpush1.bf16.msra.mxu0 %v510
  %692 = vmatprep.subr.bf16.mxu0 0
  %693 = vmatpush1.bf16.msra.mxu0 %v511
  %694 = vmatprep.subr.bf16.mxu0 0
  %695 = vmatpush1.bf16.msra.mxu0 %v512
  %696 = vmatprep.subr.bf16.mxu0 0
  %697 = vmatpush1.bf16.msra.mxu0 %v513
  %698 = vmatprep.subr.bf16.mxu0 0
  %699 = vmatpush1.bf16.msra.mxu0 %v514
  %700 = vmatprep.subr.bf16.mxu0 0
  %701 = vmatpush1.bf16.msra.mxu0 %v515
  %702 = vmatprep.subr.bf16.mxu0 0
  %703 = vmatpush1.bf16.msra.mxu0 %v516
  %704 = vmatprep.subr.bf16.mxu0 0
  %705 = vmatpush1.bf16.msra.mxu0 %v517
  %706 = vmatprep.subr.bf16.mxu0 0
  %707 = vmatpush1.bf16.msra.mxu0 %v518
  %708 = vmatprep.subr.bf16.mxu0 0
  %709 = vmatpush1.bf16.msra.mxu0 %v519
  %710 = vmatprep.subr.bf16.mxu0 0
  %711 = vmatpush1.bf16.msra.mxu0 %v520
  %712 = vmatprep.subr.bf16.mxu0 0
  %713 = vmatpush1.bf16.msra.mxu0 %v521
  %714 = vmatprep.mubr.bf16.mxu0 %v207
  %715 = vmatmul.mubr.bf16.gmra.mrb[0].mxu0 %v206
  %v716 = vpop.f32.mrb[0].mxu0
  %v717 = vadd.f32 %v677, %v716
  %v718 = vpop.f32.mrb[0].mxu0
  %v719 = vpop.f32.mrb[0].mxu0
  %v720 = vpop.f32.mrb[0].mxu0
  %721 = vdwg.mxu0
  %722 = vmatprep.subr.bf16.mxu0 0
  %723 = vmatpush1.bf16.msra.mxu0 %v522
  %724 = vmatprep.subr.bf16.mxu0 0
  %725 = vmatpush1.bf16.msra.mxu0 %v523
  %726 = vmatprep.subr.bf16.mxu0 0
  %727 = vmatpush1.bf16.msra.mxu0 %v524
  %728 = vmatprep.subr.bf16.mxu0 0
  %729 = vmatpush1.bf16.msra.mxu0 %v525
  %730 = vmatprep.subr.bf16.mxu0 0
  %731 = vmatpush1.bf16.msra.mxu0 %v526
  %732 = vmatprep.subr.bf16.mxu0 0
  %733 = vmatpush1.bf16.msra.mxu0 %v527
  %734 = vmatprep.subr.bf16.mxu0 0
  %735 = vmatpush1.bf16.msra.mxu0 %v528
  %736 = vmatprep.subr.bf16.mxu0 0
  %737 = vmatpush1.bf16.msra.mxu0 %v529
  %738 = vmatprep.subr.bf16.mxu0 0
  %739 = vmatpush1.bf16.msra.mxu0 %v530
  %740 = vmatprep.subr.bf16.mxu0 0
  %741 = vmatpush1.bf16.msra.mxu0 %v531
  %742 = vmatprep.subr.bf16.mxu0 0
  %743 = vmatpush1.bf16.msra.mxu0 %v532
  %744 = vmatprep.subr.bf16.mxu0 0
  %745 = vmatpush1.bf16.msra.mxu0 %v533
  %746 = vmatprep.subr.bf16.mxu0 0
  %747 = vmatpush1.bf16.msra.mxu0 %v534
  %748 = vmatprep.subr.bf16.mxu0 0
  %749 = vmatpush1.bf16.msra.mxu0 %v535
  %750 = vmatprep.subr.bf16.mxu0 0
  %751 = vmatpush1.bf16.msra.mxu0 %v536
  %752 = vmatprep.subr.bf16.mxu0 0
  %753 = vmatpush1.bf16.msra.mxu0 %v537
  %754 = vmatprep.mubr.bf16.mxu0 %v209
  %755 = vmatmul.mubr.bf16.gmra.mrb[0].mxu0 %v208
  %v756 = vpop.f32.mrb[0].mxu0
  %v757 = vadd.f32 %v717, %v756
  %v758 = vpop.f32.mrb[0].mxu0
  %v759 = vpop.f32.mrb[0].mxu0
  %v760 = vpop.f32.mrb[0].mxu0
  %761 = vdwg.mxu0
  %v762 = vmax.f32 %v757, 0.0
  %v763 = vpack.c.bf16 %v762, %v762
  %v764 = vld [vmem:[%s5] sm:$0xf]
  %v765 = vld [vmem:[%s5 + $0x4] sm:$0xf]
  %v766 = vld [vmem:[%s5 + $0x8] sm:$0xf]
  %v767 = vld [vmem:[%s5 + $0xc] sm:$0xf]
  %v768 = vld [vmem:[%s5 + $0x10] sm:$0xf]
  %v769 = vld [vmem:[%s5 + $0x14] sm:$0xf]
  %v770 = vld [vmem:[%s5 + $0x18] sm:$0xf]
  %v771 = vld [vmem:[%s5 + $0x1c] sm:$0xf]
  %v772 = vld [vmem:[%s5 + $0x20] sm:$0xf]
  %v773 = vld [vmem:[%s5 + $0x24] sm:$0xf]
  %v774 = vld [vmem:[%s5 + $0x28] sm:$0xf]
  %v775 = vld [vmem:[%s5 + $0x2c] sm:$0xf]
  %v776 = vld [vmem:[%s5 + $0x30] sm:$0xf]
  %v777 = vld [vmem:[%s5 + $0x34] sm:$0xf]
  %v778 = vld [vmem:[%s5 + $0x38] sm:$0xf]
  %v779 = vld [vmem:[%s5 + $0x3c] sm:$0xf]
  %v780 = vld [vmem:[%s6] sm:$0x1]
  %v782 = vlaneseq
  %v783 = vshrl.u32 %v782, 7
  %v784 = vsub.s32 0, %v783
  %v785 = vrot.slane %v780, %v784
  %v803 = vunpack.c.l.b16 %v764
  %v804 = vunpack.c.l.b16 %v765
  %v805 = vunpack.c.l.b16 %v766
  %v806 = vunpack.c.l.b16 %v767
  %v807 = vunpack.c.l.b16 %v768
  %v808 = vunpack.c.l.b16 %v769
  %v809 = vunpack.c.l.b16 %v770
  %v810 = vunpack.c.l.b16 %v771
  %v811 = vunpack.c.l.b16 %v772
  %v812 = vunpack.c.l.b16 %v773
  %v813 = vunpack.c.l.b16 %v774
  %v814 = vunpack.c.l.b16 %v775
  %v815 = vunpack.c.l.b16 %v776
  %v816 = vunpack.c.l.b16 %v777
  %v817 = vunpack.c.l.b16 %v778
  %v818 = vunpack.c.l.b16 %v779
  %v819 = vpack.c.b16 %v804, %v803
  %v820 = vpack.c.b16 %v806, %v805
  %v821 = vpack.c.b16 %v808, %v807
  %v822 = vpack.c.b16 %v810, %v809
  %v823 = vpack.c.b16 %v812, %v811
  %v824 = vpack.c.b16 %v814, %v813
  %v825 = vpack.c.b16 %v816, %v815
  %v826 = vpack.c.b16 %v818, %v817
  %835 = vmatprep.subr.bf16.mxu0 0
  %836 = vmatpush1.bf16.msra.mxu0 %v819
  %837 = vmatprep.subr.bf16.mxu0 0
  %838 = vmatpush1.bf16.msra.mxu0 %v820
  %839 = vmatprep.subr.bf16.mxu0 0
  %840 = vmatpush1.bf16.msra.mxu0 %v821
  %841 = vmatprep.subr.bf16.mxu0 0
  %842 = vmatpush1.bf16.msra.mxu0 %v822
  %843 = vmatprep.subr.bf16.mxu0 0
  %844 = vmatpush1.bf16.msra.mxu0 %v823
  %845 = vmatprep.subr.bf16.mxu0 0
  %846 = vmatpush1.bf16.msra.mxu0 %v824
  %847 = vmatprep.subr.bf16.mxu0 0
  %848 = vmatpush1.bf16.msra.mxu0 %v825
  %849 = vmatprep.subr.bf16.mxu0 0
  %850 = vmatpush1.bf16.msra.mxu0 %v826
  %851 = vmatprep.subr.bf16.mxu0 0
  %852 = vmatpush1.bf16.msra.mxu0 0
  %853 = vmatprep.subr.bf16.mxu0 0
  %854 = vmatpush1.bf16.msra.mxu0 0
  %855 = vmatprep.subr.bf16.mxu0 0
  %856 = vmatpush1.bf16.msra.mxu0 0
  %857 = vmatprep.subr.bf16.mxu0 0
  %858 = vmatpush1.bf16.msra.mxu0 0
  %859 = vmatprep.subr.bf16.mxu0 0
  %860 = vmatpush1.bf16.msra.mxu0 0
  %861 = vmatprep.subr.bf16.mxu0 0
  %862 = vmatpush1.bf16.msra.mxu0 0
  %863 = vmatprep.subr.bf16.mxu0 0
  %864 = vmatpush1.bf16.msra.mxu0 0
  %865 = vmatprep.subr.bf16.mxu0 0
  %866 = vmatpush1.bf16.msra.mxu0 0
  %867 = vmatprep.mubr.bf16.mxu0 0
  %868 = vmatmul.mubr.bf16.gmra.mrb[0].mxu0 %v763
  %v869 = vpop.f32.mrb[0].mxu0
  %v870 = vadd.f32 %v785, %v869
  %v871 = vpop.f32.mrb[0].mxu0
  %v872 = vpop.f32.mrb[0].mxu0
  %v873 = vpop.f32.mrb[0].mxu0
  %874 = vdwg.mxu0
  %v875 = vld [vmem:[%s7] sm:$0xf]
  %v876 = vld [vmem:[%s7 + $0x4] sm:$0xf]
  %v877 = vld [vmem:[%s7 + $0x8] sm:$0xf]
  %v878 = vld [vmem:[%s7 + $0xc] sm:$0xf]
  %v879 = vld [vmem:[%s7 + $0x10] sm:$0xf]
  %v880 = vld [vmem:[%s7 + $0x14] sm:$0xf]
  %v881 = vld [vmem:[%s7 + $0x18] sm:$0xf]
  %v882 = vld [vmem:[%s7 + $0x1c] sm:$0xf]
  %v883 = vld [vmem:[%s7 + $0x20] sm:$0xf]
  %v884 = vld [vmem:[%s7 + $0x24] sm:$0xf]
  %v885 = vld [vmem:[%s7 + $0x28] sm:$0xf]
  %v886 = vld [vmem:[%s7 + $0x2c] sm:$0xf]
  %v887 = vld [vmem:[%s7 + $0x30] sm:$0xf]
  %v888 = vld [vmem:[%s7 + $0x34] sm:$0xf]
  %v889 = vld [vmem:[%s7 + $0x38] sm:$0xf]
  %v890 = vld [vmem:[%s7 + $0x3c] sm:$0xf]
  %v891 = vld [vmem:[%s8] sm:$0x1]
  %v893 = vlaneseq
  %v894 = vshrl.u32 %v893, 7
  %v895 = vsub.s32 0, %v894
  %v896 = vrot.slane %v891, %v895
  %v914 = vunpack.c.l.b16 %v875
  %v915 = vunpack.c.l.b16 %v876
  %v916 = vunpack.c.l.b16 %v877
  %v917 = vunpack.c.l.b16 %v878
  %v918 = vunpack.c.l.b16 %v879
  %v919 = vunpack.c.l.b16 %v880
  %v920 = vunpack.c.l.b16 %v881
  %v921 = vunpack.c.l.b16 %v882
  %v922 = vunpack.c.l.b16 %v883
  %v923 = vunpack.c.l.b16 %v884
  %v924 = vunpack.c.l.b16 %v885
  %v925 = vunpack.c.l.b16 %v886
  %v926 = vunpack.c.l.b16 %v887
  %v927 = vunpack.c.l.b16 %v888
  %v928 = vunpack.c.l.b16 %v889
  %v929 = vunpack.c.l.b16 %v890
  %v930 = vpack.c.b16 %v915, %v914
  %v931 = vpack.c.b16 %v917, %v916
  %v932 = vpack.c.b16 %v919, %v918
  %v933 = vpack.c.b16 %v921, %v920
  %v934 = vpack.c.b16 %v923, %v922
  %v935 = vpack.c.b16 %v925, %v924
  %v936 = vpack.c.b16 %v927, %v926
  %v937 = vpack.c.b16 %v929, %v928
  %946 = vmatprep.subr.bf16.mxu0 0
  %947 = vmatpush1.bf16.msra.mxu0 %v930
  %948 = vmatprep.subr.bf16.mxu0 0
  %949 = vmatpush1.bf16.msra.mxu0 %v931
  %950 = vmatprep.subr.bf16.mxu0 0
  %951 = vmatpush1.bf16.msra.mxu0 %v932
  %952 = vmatprep.subr.bf16.mxu0 0
  %953 = vmatpush1.bf16.msra.mxu0 %v933
  %954 = vmatprep.subr.bf16.mxu0 0
  %955 = vmatpush1.bf16.msra.mxu0 %v934
  %956 = vmatprep.subr.bf16.mxu0 0
  %957 = vmatpush1.bf16.msra.mxu0 %v935
  %958 = vmatprep.subr.bf16.mxu0 0
  %959 = vmatpush1.bf16.msra.mxu0 %v936
  %960 = vmatprep.subr.bf16.mxu0 0
  %961 = vmatpush1.bf16.msra.mxu0 %v937
  %962 = vmatprep.subr.bf16.mxu0 0
  %963 = vmatpush1.bf16.msra.mxu0 0
  %964 = vmatprep.subr.bf16.mxu0 0
  %965 = vmatpush1.bf16.msra.mxu0 0
  %966 = vmatprep.subr.bf16.mxu0 0
  %967 = vmatpush1.bf16.msra.mxu0 0
  %968 = vmatprep.subr.bf16.mxu0 0
  %969 = vmatpush1.bf16.msra.mxu0 0
  %970 = vmatprep.subr.bf16.mxu0 0
  %971 = vmatpush1.bf16.msra.mxu0 0
  %972 = vmatprep.subr.bf16.mxu0 0
  %973 = vmatpush1.bf16.msra.mxu0 0
  %974 = vmatprep.subr.bf16.mxu0 0
  %975 = vmatpush1.bf16.msra.mxu0 0
  %976 = vmatprep.subr.bf16.mxu0 0
  %977 = vmatpush1.bf16.msra.mxu0 0
  %978 = vmatprep.mubr.bf16.mxu0 0
  %979 = vmatmul.mubr.bf16.gmra.mrb[0].mxu0 %v763
  %v980 = vpop.f32.mrb[0].mxu0
  %v981 = vadd.f32 %v896, %v980
  %v982 = vpop.f32.mrb[0].mxu0
  %v983 = vpop.f32.mrb[0].mxu0
  %v984 = vpop.f32.mrb[0].mxu0
  %985 = vdwg.mxu0
  %vm986 = vcmask 130048
  %987 = vst.msk [vmem:[%s15] sm:$0xff] %vm986, %v870
  %989 = vrot.lane.b32.xlu0 %v981, 16
  %v990 = vpop.permute.xlu0 %989
  %vm992 = vcmask 261248
  %993 = vst.msk [vmem:[%s15] sm:$0xff] %vm992, %v990
  %v994 = vmul.f32 %v981, 0.5
  %v995 = vmul.f32 %v994, 1.442695
  %v996 = vpow.pop %v995
  %v997 = vld [vmem:[%s2] sm:$0xff]
  %v998 = vmul.f32 %v996, %v997
  %v999 = vadd.f32 %v870, %v998
  %1000 = vst.msk [vmem:[%s16] sm:$0xff] %vm986, %v999
  %v1001 = vlaneseq
  %v1002 = vand.u32 %v1001, 127
  %v1003 = vld [vmem:[%s1] sm:$0xff]
  %1004 = vset.pattern.permute.xlu0 0
  %1005 = vperm.xlu0 %1004, %v1003
  %v1006 = vpop.permute.xlu0 %1005
  %vm1007 = vcmp.eq.s32.totalorder %v1002, %v1006
  %v1008 = vsel %vm1007, 1, 0
  %v1009 = vcvt.s32.f32 %v1008
  %v1010 = vpack.c.bf16 %v1009, %v1009
  %v1011 = vld [vmem:[%s10] sm:$0xf]
  %v1012 = vld [vmem:[%s10 + $0x4] sm:$0x1]
  %v1015 = vunpack.c.l.b16 %v1011
  %v1016 = vunpack.c.l.b16 %v1012
  %v1017 = vpack.c.b16 %v1016, %v1015
  %vm1018 = vcmask 80896
  %v1020 = vsel %vm1018, %v1010, 0
  %vm1022 = vcmask 1044480
  %v1024 = vsel %vm1022, %v1017, 0
  %1026 = vmatprep.subr.bf16.mxu0 0
  %1027 = vmatpush1.bf16.msra.mxu0 %v1024
  %1028 = vmatprep.subr.bf16.mxu0 0
  %1029 = vmatpush1.bf16.msra.mxu0 0
  %1030 = vmatprep.subr.bf16.mxu0 0
  %1031 = vmatpush1.bf16.msra.mxu0 0
  %1032 = vmatprep.subr.bf16.mxu0 0
  %1033 = vmatpush1.bf16.msra.mxu0 0
  %1034 = vmatprep.subr.bf16.mxu0 0
  %1035 = vmatpush1.bf16.msra.mxu0 0
  %1036 = vmatprep.subr.bf16.mxu0 0
  %1037 = vmatpush1.bf16.msra.mxu0 0
  %1038 = vmatprep.subr.bf16.mxu0 0
  %1039 = vmatpush1.bf16.msra.mxu0 0
  %1040 = vmatprep.subr.bf16.mxu0 0
  %1041 = vmatpush1.bf16.msra.mxu0 0
  %1042 = vmatprep.subr.bf16.mxu0 0
  %1043 = vmatpush1.bf16.msra.mxu0 0
  %1044 = vmatprep.subr.bf16.mxu0 0
  %1045 = vmatpush1.bf16.msra.mxu0 0
  %1046 = vmatprep.subr.bf16.mxu0 0
  %1047 = vmatpush1.bf16.msra.mxu0 0
  %1048 = vmatprep.subr.bf16.mxu0 0
  %1049 = vmatpush1.bf16.msra.mxu0 0
  %1050 = vmatprep.subr.bf16.mxu0 0
  %1051 = vmatpush1.bf16.msra.mxu0 0
  %1052 = vmatprep.subr.bf16.mxu0 0
  %1053 = vmatpush1.bf16.msra.mxu0 0
  %1054 = vmatprep.subr.bf16.mxu0 0
  %1055 = vmatpush1.bf16.msra.mxu0 0
  %1056 = vmatprep.subr.bf16.mxu0 0
  %1057 = vmatpush1.bf16.msra.mxu0 0
  %1058 = vmatprep.mubr.bf16.mxu0 0
  %1059 = vmatmul.mubr.bf16.gmra.mrb[0].mxu0 %v1020
  %v1060 = vpop.f32.mrb[0].mxu0
  %v1061 = vadd.f32 0.0, %v1060
  %v1062 = vpop.f32.mrb[0].mxu0
  %v1063 = vpop.f32.mrb[0].mxu0
  %v1064 = vpop.f32.mrb[0].mxu0
  %1065 = vdwg.mxu0
  %v1066 = vpack.c.bf16 %v999, %v999
  %v1067 = vld [vmem:[%s9] sm:$0xf]
  %v1068 = vld [vmem:[%s9 + $0x4] sm:$0xf]
  %v1071 = vunpack.c.l.b16 %v1067
  %v1072 = vunpack.c.l.b16 %v1068
  %v1073 = vpack.c.b16 %v1072, %v1071
  %v1076 = vsel %vm986, %v1066, 0
  %1078 = vmatprep.subr.bf16.mxu0 0
  %1079 = vmatpush1.bf16.msra.mxu0 %v1073
  %1080 = vmatprep.subr.bf16.mxu0 0
  %1081 = vmatpush1.bf16.msra.mxu0 0
  %1082 = vmatprep.subr.bf16.mxu0 0
  %1083 = vmatpush1.bf16.msra.mxu0 0
  %1084 = vmatprep.subr.bf16.mxu0 0
  %1085 = vmatpush1.bf16.msra.mxu0 0
  %1086 = vmatprep.subr.bf16.mxu0 0
  %1087 = vmatpush1.bf16.msra.mxu0 0
  %1088 = vmatprep.subr.bf16.mxu0 0
  %1089 = vmatpush1.bf16.msra.mxu0 0
  %1090 = vmatprep.subr.bf16.mxu0 0
  %1091 = vmatpush1.bf16.msra.mxu0 0
  %1092 = vmatprep.subr.bf16.mxu0 0
  %1093 = vmatpush1.bf16.msra.mxu0 0
  %1094 = vmatprep.subr.bf16.mxu0 0
  %1095 = vmatpush1.bf16.msra.mxu0 0
  %1096 = vmatprep.subr.bf16.mxu0 0
  %1097 = vmatpush1.bf16.msra.mxu0 0
  %1098 = vmatprep.subr.bf16.mxu0 0
  %1099 = vmatpush1.bf16.msra.mxu0 0
  %1100 = vmatprep.subr.bf16.mxu0 0
  %1101 = vmatpush1.bf16.msra.mxu0 0
  %1102 = vmatprep.subr.bf16.mxu0 0
  %1103 = vmatpush1.bf16.msra.mxu0 0
  %1104 = vmatprep.subr.bf16.mxu0 0
  %1105 = vmatpush1.bf16.msra.mxu0 0
  %1106 = vmatprep.subr.bf16.mxu0 0
  %1107 = vmatpush1.bf16.msra.mxu0 0
  %1108 = vmatprep.subr.bf16.mxu0 0
  %1109 = vmatpush1.bf16.msra.mxu0 0
  %1110 = vmatprep.mubr.bf16.mxu0 0
  %1111 = vmatmul.mubr.bf16.gmra.mrb[0].mxu0 %v1076
  %v1112 = vpop.f32.mrb[0].mxu0
  %v1113 = vadd.f32 %v1061, %v1112
  %v1114 = vpop.f32.mrb[0].mxu0
  %v1115 = vpop.f32.mrb[0].mxu0
  %v1116 = vpop.f32.mrb[0].mxu0
  %1117 = vdwg.mxu0
  %v1118 = vld [vmem:[%s11] sm:$0x1]
  %v1120 = vlaneseq
  %v1121 = vshrl.u32 %v1120, 7
  %v1122 = vsub.s32 0, %v1121
  %v1123 = vrot.slane %v1118, %v1122
  %v1125 = vadd.f32 %v1113, %v1123
  %v1126 = vmax.f32 %v1125, 0.0
  %v1127 = vpack.c.bf16 %v1126, %v1126
  %v1128 = vld [vmem:[%s12] sm:$0xff]
  %v1129 = vld [vmem:[%s12 + $0x8] sm:$0xff]
  %v1130 = vld [vmem:[%s12 + $0x10] sm:$0xff]
  %v1131 = vld [vmem:[%s12 + $0x18] sm:$0xff]
  %v1132 = vld [vmem:[%s12 + $0x20] sm:$0xff]
  %v1133 = vld [vmem:[%s12 + $0x28] sm:$0xff]
  %v1134 = vld [vmem:[%s12 + $0x30] sm:$0xff]
  %v1135 = vld [vmem:[%s12 + $0x38] sm:$0xff]
  %v1136 = vld [vmem:[%s12 + $0x40] sm:$0xff]
  %v1137 = vld [vmem:[%s12 + $0x48] sm:$0xff]
  %v1138 = vld [vmem:[%s12 + $0x50] sm:$0xff]
  %v1139 = vld [vmem:[%s12 + $0x58] sm:$0xff]
  %v1140 = vld [vmem:[%s12 + $0x60] sm:$0xff]
  %v1141 = vld [vmem:[%s12 + $0x68] sm:$0xff]
  %v1142 = vld [vmem:[%s12 + $0x70] sm:$0xff]
  %v1143 = vld [vmem:[%s12 + $0x78] sm:$0xff]
  %v1144 = vld [vmem:[%s12 + $0x80] sm:$0xff]
  %v1145 = vld [vmem:[%s12 + $0x88] sm:$0xff]
  %v1146 = vld [vmem:[%s12 + $0x90] sm:$0xff]
  %v1147 = vld [vmem:[%s12 + $0x98] sm:$0xff]
  %v1148 = vld [vmem:[%s12 + $0xa0] sm:$0xff]
  %v1149 = vld [vmem:[%s12 + $0xa8] sm:$0xff]
  %v1150 = vld [vmem:[%s12 + $0xb0] sm:$0xff]
  %v1151 = vld [vmem:[%s12 + $0xb8] sm:$0xff]
  %v1152 = vld [vmem:[%s12 + $0xc0] sm:$0xff]
  %v1153 = vld [vmem:[%s12 + $0xc8] sm:$0xff]
  %v1154 = vld [vmem:[%s12 + $0xd0] sm:$0xff]
  %v1155 = vld [vmem:[%s12 + $0xd8] sm:$0xff]
  %v1156 = vld [vmem:[%s12 + $0xe0] sm:$0xff]
  %v1157 = vld [vmem:[%s12 + $0xe8] sm:$0xff]
  %v1158 = vld [vmem:[%s12 + $0xf0] sm:$0xff]
  %v1159 = vld [vmem:[%s12 + $0xf8] sm:$0xff]
  %v1160 = vld [vmem:[%s12 + $0x100] sm:$0xff]
  %v1161 = vld [vmem:[%s12 + $0x108] sm:$0xff]
  %v1162 = vld [vmem:[%s12 + $0x110] sm:$0xff]
  %v1163 = vld [vmem:[%s12 + $0x118] sm:$0xff]
  %v1164 = vld [vmem:[%s12 + $0x120] sm:$0xff]
  %v1165 = vld [vmem:[%s12 + $0x128] sm:$0xff]
  %v1166 = vld [vmem:[%s12 + $0x130] sm:$0xff]
  %v1167 = vld [vmem:[%s12 + $0x138] sm:$0xff]
  %v1168 = vld [vmem:[%s12 + $0x140] sm:$0xff]
  %v1169 = vld [vmem:[%s12 + $0x148] sm:$0xff]
  %v1170 = vld [vmem:[%s12 + $0x150] sm:$0xff]
  %v1171 = vld [vmem:[%s12 + $0x158] sm:$0xff]
  %v1172 = vld [vmem:[%s12 + $0x160] sm:$0xff]
  %v1173 = vld [vmem:[%s12 + $0x168] sm:$0xff]
  %v1174 = vld [vmem:[%s12 + $0x170] sm:$0xff]
  %v1175 = vld [vmem:[%s12 + $0x178] sm:$0xff]
  %v1176 = vld [vmem:[%s12 + $0x180] sm:$0xff]
  %v1177 = vld [vmem:[%s12 + $0x188] sm:$0xff]
  %v1178 = vld [vmem:[%s12 + $0x190] sm:$0xff]
  %v1179 = vld [vmem:[%s12 + $0x198] sm:$0xff]
  %v1180 = vld [vmem:[%s12 + $0x1a0] sm:$0xff]
  %v1181 = vld [vmem:[%s12 + $0x1a8] sm:$0xff]
  %v1182 = vld [vmem:[%s12 + $0x1b0] sm:$0xff]
  %v1183 = vld [vmem:[%s12 + $0x1b8] sm:$0xff]
  %v1184 = vld [vmem:[%s12 + $0x1c0] sm:$0xff]
  %v1185 = vld [vmem:[%s12 + $0x1c8] sm:$0xff]
  %v1186 = vld [vmem:[%s12 + $0x1d0] sm:$0xff]
  %v1187 = vld [vmem:[%s12 + $0x1d8] sm:$0xff]
  %v1188 = vld [vmem:[%s12 + $0x1e0] sm:$0xff]
  %v1189 = vld [vmem:[%s12 + $0x1e8] sm:$0xff]
  %v1190 = vld [vmem:[%s12 + $0x1f0] sm:$0xff]
  %v1191 = vld [vmem:[%s12 + $0x1f8] sm:$0xff]
  %v1192 = vld [vmem:[%s13] sm:$0xff]
  %v1194 = vlaneseq
  %v1195 = vshrl.u32 %v1194, 7
  %v1196 = vsub.s32 0, %v1195
  %v1197 = vrot.slane %v1192, %v1196
  %v1198 = vlaneseq
  %v1199 = vshrl.u32 %v1198, 7
  %v1200 = vsub.s32 1, %v1199
  %v1201 = vrot.slane %v1192, %v1200
  %v1202 = vlaneseq
  %v1203 = vshrl.u32 %v1202, 7
  %v1204 = vsub.s32 2, %v1203
  %v1205 = vrot.slane %v1192, %v1204
  %v1206 = vlaneseq
  %v1207 = vshrl.u32 %v1206, 7
  %v1208 = vsub.s32 3, %v1207
  %v1209 = vrot.slane %v1192, %v1208
  %v1210 = vlaneseq
  %v1211 = vshrl.u32 %v1210, 7
  %v1212 = vsub.s32 4, %v1211
  %v1213 = vrot.slane %v1192, %v1212
  %v1214 = vlaneseq
  %v1215 = vshrl.u32 %v1214, 7
  %v1216 = vsub.s32 5, %v1215
  %v1217 = vrot.slane %v1192, %v1216
  %v1218 = vlaneseq
  %v1219 = vshrl.u32 %v1218, 7
  %v1220 = vsub.s32 6, %v1219
  %v1221 = vrot.slane %v1192, %v1220
  %v1222 = vlaneseq
  %v1223 = vshrl.u32 %v1222, 7
  %v1224 = vsub.s32 7, %v1223
  %v1225 = vrot.slane %v1192, %v1224
  %v1298 = vunpack.c.l.b16 %v1128
  %v1299 = vunpack.c.h.b16 %v1128
  %v1300 = vunpack.c.l.b16 %v1129
  %v1301 = vunpack.c.h.b16 %v1129
  %v1302 = vunpack.c.l.b16 %v1130
  %v1303 = vunpack.c.h.b16 %v1130
  %v1304 = vunpack.c.l.b16 %v1131
  %v1305 = vunpack.c.h.b16 %v1131
  %v1306 = vunpack.c.l.b16 %v1132
  %v1307 = vunpack.c.h.b16 %v1132
  %v1308 = vunpack.c.l.b16 %v1133
  %v1309 = vunpack.c.h.b16 %v1133
  %v1310 = vunpack.c.l.b16 %v1134
  %v1311 = vunpack.c.h.b16 %v1134
  %v1312 = vunpack.c.l.b16 %v1135
  %v1313 = vunpack.c.h.b16 %v1135
  %v1314 = vunpack.c.l.b16 %v1136
  %v1315 = vunpack.c.h.b16 %v1136
  %v1316 = vunpack.c.l.b16 %v1137
  %v1317 = vunpack.c.h.b16 %v1137
  %v1318 = vunpack.c.l.b16 %v1138
  %v1319 = vunpack.c.h.b16 %v1138
  %v1320 = vunpack.c.l.b16 %v1139
  %v1321 = vunpack.c.h.b16 %v1139
  %v1322 = vunpack.c.l.b16 %v1140
  %v1323 = vunpack.c.h.b16 %v1140
  %v1324 = vunpack.c.l.b16 %v1141
  %v1325 = vunpack.c.h.b16 %v1141
  %v1326 = vunpack.c.l.b16 %v1142
  %v1327 = vunpack.c.h.b16 %v1142
  %v1328 = vunpack.c.l.b16 %v1143
  %v1329 = vunpack.c.h.b16 %v1143
  %v1330 = vunpack.c.l.b16 %v1144
  %v1331 = vunpack.c.h.b16 %v1144
  %v1332 = vunpack.c.l.b16 %v1145
  %v1333 = vunpack.c.h.b16 %v1145
  %v1334 = vunpack.c.l.b16 %v1146
  %v1335 = vunpack.c.h.b16 %v1146
  %v1336 = vunpack.c.l.b16 %v1147
  %v1337 = vunpack.c.h.b16 %v1147
  %v1338 = vunpack.c.l.b16 %v1148
  %v1339 = vunpack.c.h.b16 %v1148
  %v1340 = vunpack.c.l.b16 %v1149
  %v1341 = vunpack.c.h.b16 %v1149
  %v1342 = vunpack.c.l.b16 %v1150
  %v1343 = vunpack.c.h.b16 %v1150
  %v1344 = vunpack.c.l.b16 %v1151
  %v1345 = vunpack.c.h.b16 %v1151
  %v1346 = vunpack.c.l.b16 %v1152
  %v1347 = vunpack.c.h.b16 %v1152
  %v1348 = vunpack.c.l.b16 %v1153
  %v1349 = vunpack.c.h.b16 %v1153
  %v1350 = vunpack.c.l.b16 %v1154
  %v1351 = vunpack.c.h.b16 %v1154
  %v1352 = vunpack.c.l.b16 %v1155
  %v1353 = vunpack.c.h.b16 %v1155
  %v1354 = vunpack.c.l.b16 %v1156
  %v1355 = vunpack.c.h.b16 %v1156
  %v1356 = vunpack.c.l.b16 %v1157
  %v1357 = vunpack.c.h.b16 %v1157
  %v1358 = vunpack.c.l.b16 %v1158
  %v1359 = vunpack.c.h.b16 %v1158
  %v1360 = vunpack.c.l.b16 %v1159
  %v1361 = vunpack.c.h.b16 %v1159
  %v1362 = vunpack.c.l.b16 %v1160
  %v1363 = vunpack.c.h.b16 %v1160
  %v1364 = vunpack.c.l.b16 %v1161
  %v1365 = vunpack.c.h.b16 %v1161
  %v1366 = vunpack.c.l.b16 %v1162
  %v1367 = vunpack.c.h.b16 %v1162
  %v1368 = vunpack.c.l.b16 %v1163
  %v1369 = vunpack.c.h.b16 %v1163
  %v1370 = vunpack.c.l.b16 %v1164
  %v1371 = vunpack.c.h.b16 %v1164
  %v1372 = vunpack.c.l.b16 %v1165
  %v1373 = vunpack.c.h.b16 %v1165
  %v1374 = vunpack.c.l.b16 %v1166
  %v1375 = vunpack.c.h.b16 %v1166
  %v1376 = vunpack.c.l.b16 %v1167
  %v1377 = vunpack.c.h.b16 %v1167
  %v1378 = vunpack.c.l.b16 %v1168
  %v1379 = vunpack.c.h.b16 %v1168
  %v1380 = vunpack.c.l.b16 %v1169
  %v1381 = vunpack.c.h.b16 %v1169
  %v1382 = vunpack.c.l.b16 %v1170
  %v1383 = vunpack.c.h.b16 %v1170
  %v1384 = vunpack.c.l.b16 %v1171
  %v1385 = vunpack.c.h.b16 %v1171
  %v1386 = vunpack.c.l.b16 %v1172
  %v1387 = vunpack.c.h.b16 %v1172
  %v1388 = vunpack.c.l.b16 %v1173
  %v1389 = vunpack.c.h.b16 %v1173
  %v1390 = vunpack.c.l.b16 %v1174
  %v1391 = vunpack.c.h.b16 %v1174
  %v1392 = vunpack.c.l.b16 %v1175
  %v1393 = vunpack.c.h.b16 %v1175
  %v1394 = vunpack.c.l.b16 %v1176
  %v1395 = vunpack.c.h.b16 %v1176
  %v1396 = vunpack.c.l.b16 %v1177
  %v1397 = vunpack.c.h.b16 %v1177
  %v1398 = vunpack.c.l.b16 %v1178
  %v1399 = vunpack.c.h.b16 %v1178
  %v1400 = vunpack.c.l.b16 %v1179
  %v1401 = vunpack.c.h.b16 %v1179
  %v1402 = vunpack.c.l.b16 %v1180
  %v1403 = vunpack.c.h.b16 %v1180
  %v1404 = vunpack.c.l.b16 %v1181
  %v1405 = vunpack.c.h.b16 %v1181
  %v1406 = vunpack.c.l.b16 %v1182
  %v1407 = vunpack.c.h.b16 %v1182
  %v1408 = vunpack.c.l.b16 %v1183
  %v1409 = vunpack.c.h.b16 %v1183
  %v1410 = vunpack.c.l.b16 %v1184
  %v1411 = vunpack.c.h.b16 %v1184
  %v1412 = vunpack.c.l.b16 %v1185
  %v1413 = vunpack.c.h.b16 %v1185
  %v1414 = vunpack.c.l.b16 %v1186
  %v1415 = vunpack.c.h.b16 %v1186
  %v1416 = vunpack.c.l.b16 %v1187
  %v1417 = vunpack.c.h.b16 %v1187
  %v1418 = vunpack.c.l.b16 %v1188
  %v1419 = vunpack.c.h.b16 %v1188
  %v1420 = vunpack.c.l.b16 %v1189
  %v1421 = vunpack.c.h.b16 %v1189
  %v1422 = vunpack.c.l.b16 %v1190
  %v1423 = vunpack.c.h.b16 %v1190
  %v1424 = vunpack.c.l.b16 %v1191
  %v1425 = vunpack.c.h.b16 %v1191
  %v1426 = vpack.c.b16 %v1306, %v1298
  %v1427 = vpack.c.b16 %v1307, %v1299
  %v1428 = vpack.c.b16 %v1308, %v1300
  %v1429 = vpack.c.b16 %v1309, %v1301
  %v1430 = vpack.c.b16 %v1310, %v1302
  %v1431 = vpack.c.b16 %v1311, %v1303
  %v1432 = vpack.c.b16 %v1312, %v1304
  %v1433 = vpack.c.b16 %v1313, %v1305
  %v1434 = vpack.c.b16 %v1322, %v1314
  %v1435 = vpack.c.b16 %v1323, %v1315
  %v1436 = vpack.c.b16 %v1324, %v1316
  %v1437 = vpack.c.b16 %v1325, %v1317
  %v1438 = vpack.c.b16 %v1326, %v1318
  %v1439 = vpack.c.b16 %v1327, %v1319
  %v1440 = vpack.c.b16 %v1328, %v1320
  %v1441 = vpack.c.b16 %v1329, %v1321
  %v1442 = vpack.c.b16 %v1338, %v1330
  %v1443 = vpack.c.b16 %v1339, %v1331
  %v1444 = vpack.c.b16 %v1340, %v1332
  %v1445 = vpack.c.b16 %v1341, %v1333
  %v1446 = vpack.c.b16 %v1342, %v1334
  %v1447 = vpack.c.b16 %v1343, %v1335
  %v1448 = vpack.c.b16 %v1344, %v1336
  %v1449 = vpack.c.b16 %v1345, %v1337
  %v1450 = vpack.c.b16 %v1354, %v1346
  %v1451 = vpack.c.b16 %v1355, %v1347
  %v1452 = vpack.c.b16 %v1356, %v1348
  %v1453 = vpack.c.b16 %v1357, %v1349
  %v1454 = vpack.c.b16 %v1358, %v1350
  %v1455 = vpack.c.b16 %v1359, %v1351
  %v1456 = vpack.c.b16 %v1360, %v1352
  %v1457 = vpack.c.b16 %v1361, %v1353
  %v1458 = vpack.c.b16 %v1370, %v1362
  %v1459 = vpack.c.b16 %v1371, %v1363
  %v1460 = vpack.c.b16 %v1372, %v1364
  %v1461 = vpack.c.b16 %v1373, %v1365
  %v1462 = vpack.c.b16 %v1374, %v1366
  %v1463 = vpack.c.b16 %v1375, %v1367
  %v1464 = vpack.c.b16 %v1376, %v1368
  %v1465 = vpack.c.b16 %v1377, %v1369
  %v1466 = vpack.c.b16 %v1386, %v1378
  %v1467 = vpack.c.b16 %v1387, %v1379
  %v1468 = vpack.c.b16 %v1388, %v1380
  %v1469 = vpack.c.b16 %v1389, %v1381
  %v1470 = vpack.c.b16 %v1390, %v1382
  %v1471 = vpack.c.b16 %v1391, %v1383
  %v1472 = vpack.c.b16 %v1392, %v1384
  %v1473 = vpack.c.b16 %v1393, %v1385
  %v1474 = vpack.c.b16 %v1402, %v1394
  %v1475 = vpack.c.b16 %v1403, %v1395
  %v1476 = vpack.c.b16 %v1404, %v1396
  %v1477 = vpack.c.b16 %v1405, %v1397
  %v1478 = vpack.c.b16 %v1406, %v1398
  %v1479 = vpack.c.b16 %v1407, %v1399
  %v1480 = vpack.c.b16 %v1408, %v1400
  %v1481 = vpack.c.b16 %v1409, %v1401
  %v1482 = vpack.c.b16 %v1418, %v1410
  %v1483 = vpack.c.b16 %v1419, %v1411
  %v1484 = vpack.c.b16 %v1420, %v1412
  %v1485 = vpack.c.b16 %v1421, %v1413
  %v1486 = vpack.c.b16 %v1422, %v1414
  %v1487 = vpack.c.b16 %v1423, %v1415
  %v1488 = vpack.c.b16 %v1424, %v1416
  %v1489 = vpack.c.b16 %v1425, %v1417
  %1554 = vmatprep.subr.bf16.mxu0 %v1427
  %1555 = vmatpush1.bf16.msra.mxu0 %v1426
  %1556 = vmatprep.subr.bf16.mxu0 %v1435
  %1557 = vmatpush1.bf16.msra.mxu0 %v1434
  %1558 = vmatprep.subr.bf16.mxu0 %v1443
  %1559 = vmatpush1.bf16.msra.mxu0 %v1442
  %1560 = vmatprep.subr.bf16.mxu0 %v1451
  %1561 = vmatpush1.bf16.msra.mxu0 %v1450
  %1562 = vmatprep.subr.bf16.mxu0 %v1459
  %1563 = vmatpush1.bf16.msra.mxu0 %v1458
  %1564 = vmatprep.subr.bf16.mxu0 %v1467
  %1565 = vmatpush1.bf16.msra.mxu0 %v1466
  %1566 = vmatprep.subr.bf16.mxu0 %v1475
  %1567 = vmatpush1.bf16.msra.mxu0 %v1474
  %1568 = vmatprep.subr.bf16.mxu0 %v1483
  %1569 = vmatpush1.bf16.msra.mxu0 %v1482
  %1570 = vmatprep.subr.bf16.mxu0 0
  %1571 = vmatpush1.bf16.msra.mxu0 0
  %1572 = vmatprep.subr.bf16.mxu0 0
  %1573 = vmatpush1.bf16.msra.mxu0 0
  %1574 = vmatprep.subr.bf16.mxu0 0
  %1575 = vmatpush1.bf16.msra.mxu0 0
  %1576 = vmatprep.subr.bf16.mxu0 0
  %1577 = vmatpush1.bf16.msra.mxu0 0
  %1578 = vmatprep.subr.bf16.mxu0 0
  %1579 = vmatpush1.bf16.msra.mxu0 0
  %1580 = vmatprep.subr.bf16.mxu0 0
  %1581 = vmatpush1.bf16.msra.mxu0 0
  %1582 = vmatprep.subr.bf16.mxu0 0
  %1583 = vmatpush1.bf16.msra.mxu0 0
  %1584 = vmatprep.subr.bf16.mxu0 0
  %1585 = vmatpush1.bf16.msra.mxu0 0
  %1586 = vmatprep.mubr.bf16.mxu0 0
  %1587 = vmatmul.mubr.bf16.gmra.mrb[0].mxu0 %v1127
  %v1588 = vpop.f32.mrb[0].mxu0
  %v1589 = vadd.f32 %v1197, %v1588
  %v1590 = vpop.f32.mrb[0].mxu0
  %v1591 = vadd.f32 %v1201, %v1590
  %v1592 = vpop.f32.mrb[0].mxu0
  %v1593 = vpop.f32.mrb[0].mxu0
  %1594 = vdwg.mxu0
  %1595 = vmatprep.subr.bf16.mxu0 %v1429
  %1596 = vmatpush1.bf16.msra.mxu0 %v1428
  %1597 = vmatprep.subr.bf16.mxu0 %v1437
  %1598 = vmatpush1.bf16.msra.mxu0 %v1436
  %1599 = vmatprep.subr.bf16.mxu0 %v1445
  %1600 = vmatpush1.bf16.msra.mxu0 %v1444
  %1601 = vmatprep.subr.bf16.mxu0 %v1453
  %1602 = vmatpush1.bf16.msra.mxu0 %v1452
  %1603 = vmatprep.subr.bf16.mxu0 %v1461
  %1604 = vmatpush1.bf16.msra.mxu0 %v1460
  %1605 = vmatprep.subr.bf16.mxu0 %v1469
  %1606 = vmatpush1.bf16.msra.mxu0 %v1468
  %1607 = vmatprep.subr.bf16.mxu0 %v1477
  %1608 = vmatpush1.bf16.msra.mxu0 %v1476
  %1609 = vmatprep.subr.bf16.mxu0 %v1485
  %1610 = vmatpush1.bf16.msra.mxu0 %v1484
  %1611 = vmatprep.subr.bf16.mxu0 0
  %1612 = vmatpush1.bf16.msra.mxu0 0
  %1613 = vmatprep.subr.bf16.mxu0 0
  %1614 = vmatpush1.bf16.msra.mxu0 0
  %1615 = vmatprep.subr.bf16.mxu0 0
  %1616 = vmatpush1.bf16.msra.mxu0 0
  %1617 = vmatprep.subr.bf16.mxu0 0
  %1618 = vmatpush1.bf16.msra.mxu0 0
  %1619 = vmatprep.subr.bf16.mxu0 0
  %1620 = vmatpush1.bf16.msra.mxu0 0
  %1621 = vmatprep.subr.bf16.mxu0 0
  %1622 = vmatpush1.bf16.msra.mxu0 0
  %1623 = vmatprep.subr.bf16.mxu0 0
  %1624 = vmatpush1.bf16.msra.mxu0 0
  %1625 = vmatprep.subr.bf16.mxu0 0
  %1626 = vmatpush1.bf16.msra.mxu0 0
  %1627 = vmatprep.mubr.bf16.mxu0 0
  %1628 = vmatmul.mubr.bf16.gmra.mrb[0].mxu0 %v1127
  %v1629 = vpop.f32.mrb[0].mxu0
  %v1630 = vadd.f32 %v1205, %v1629
  %v1631 = vpop.f32.mrb[0].mxu0
  %v1632 = vadd.f32 %v1209, %v1631
  %v1633 = vpop.f32.mrb[0].mxu0
  %v1634 = vpop.f32.mrb[0].mxu0
  %1635 = vdwg.mxu0
  %1636 = vmatprep.subr.bf16.mxu0 %v1431
  %1637 = vmatpush1.bf16.msra.mxu0 %v1430
  %1638 = vmatprep.subr.bf16.mxu0 %v1439
  %1639 = vmatpush1.bf16.msra.mxu0 %v1438
  %1640 = vmatprep.subr.bf16.mxu0 %v1447
  %1641 = vmatpush1.bf16.msra.mxu0 %v1446
  %1642 = vmatprep.subr.bf16.mxu0 %v1455
  %1643 = vmatpush1.bf16.msra.mxu0 %v1454
  %1644 = vmatprep.subr.bf16.mxu0 %v1463
  %1645 = vmatpush1.bf16.msra.mxu0 %v1462
  %1646 = vmatprep.subr.bf16.mxu0 %v1471
  %1647 = vmatpush1.bf16.msra.mxu0 %v1470
  %1648 = vmatprep.subr.bf16.mxu0 %v1479
  %1649 = vmatpush1.bf16.msra.mxu0 %v1478
  %1650 = vmatprep.subr.bf16.mxu0 %v1487
  %1651 = vmatpush1.bf16.msra.mxu0 %v1486
  %1652 = vmatprep.subr.bf16.mxu0 0
  %1653 = vmatpush1.bf16.msra.mxu0 0
  %1654 = vmatprep.subr.bf16.mxu0 0
  %1655 = vmatpush1.bf16.msra.mxu0 0
  %1656 = vmatprep.subr.bf16.mxu0 0
  %1657 = vmatpush1.bf16.msra.mxu0 0
  %1658 = vmatprep.subr.bf16.mxu0 0
  %1659 = vmatpush1.bf16.msra.mxu0 0
  %1660 = vmatprep.subr.bf16.mxu0 0
  %1661 = vmatpush1.bf16.msra.mxu0 0
  %1662 = vmatprep.subr.bf16.mxu0 0
  %1663 = vmatpush1.bf16.msra.mxu0 0
  %1664 = vmatprep.subr.bf16.mxu0 0
  %1665 = vmatpush1.bf16.msra.mxu0 0
  %1666 = vmatprep.subr.bf16.mxu0 0
  %1667 = vmatpush1.bf16.msra.mxu0 0
  %1668 = vmatprep.mubr.bf16.mxu0 0
  %1669 = vmatmul.mubr.bf16.gmra.mrb[0].mxu0 %v1127
  %v1670 = vpop.f32.mrb[0].mxu0
  %v1671 = vadd.f32 %v1213, %v1670
  %v1672 = vpop.f32.mrb[0].mxu0
  %v1673 = vadd.f32 %v1217, %v1672
  %v1674 = vpop.f32.mrb[0].mxu0
  %v1675 = vpop.f32.mrb[0].mxu0
  %1676 = vdwg.mxu0
  %1677 = vmatprep.subr.bf16.mxu0 %v1433
  %1678 = vmatpush1.bf16.msra.mxu0 %v1432
  %1679 = vmatprep.subr.bf16.mxu0 %v1441
  %1680 = vmatpush1.bf16.msra.mxu0 %v1440
  %1681 = vmatprep.subr.bf16.mxu0 %v1449
  %1682 = vmatpush1.bf16.msra.mxu0 %v1448
  %1683 = vmatprep.subr.bf16.mxu0 %v1457
  %1684 = vmatpush1.bf16.msra.mxu0 %v1456
  %1685 = vmatprep.subr.bf16.mxu0 %v1465
  %1686 = vmatpush1.bf16.msra.mxu0 %v1464
  %1687 = vmatprep.subr.bf16.mxu0 %v1473
  %1688 = vmatpush1.bf16.msra.mxu0 %v1472
  %1689 = vmatprep.subr.bf16.mxu0 %v1481
  %1690 = vmatpush1.bf16.msra.mxu0 %v1480
  %1691 = vmatprep.subr.bf16.mxu0 %v1489
  %1692 = vmatpush1.bf16.msra.mxu0 %v1488
  %1693 = vmatprep.subr.bf16.mxu0 0
  %1694 = vmatpush1.bf16.msra.mxu0 0
  %1695 = vmatprep.subr.bf16.mxu0 0
  %1696 = vmatpush1.bf16.msra.mxu0 0
  %1697 = vmatprep.subr.bf16.mxu0 0
  %1698 = vmatpush1.bf16.msra.mxu0 0
  %1699 = vmatprep.subr.bf16.mxu0 0
  %1700 = vmatpush1.bf16.msra.mxu0 0
  %1701 = vmatprep.subr.bf16.mxu0 0
  %1702 = vmatpush1.bf16.msra.mxu0 0
  %1703 = vmatprep.subr.bf16.mxu0 0
  %1704 = vmatpush1.bf16.msra.mxu0 0
  %1705 = vmatprep.subr.bf16.mxu0 0
  %1706 = vmatpush1.bf16.msra.mxu0 0
  %1707 = vmatprep.subr.bf16.mxu0 0
  %1708 = vmatpush1.bf16.msra.mxu0 0
  %1709 = vmatprep.mubr.bf16.mxu0 0
  %1710 = vmatmul.mubr.bf16.gmra.mrb[0].mxu0 %v1127
  %v1711 = vpop.f32.mrb[0].mxu0
  %v1712 = vadd.f32 %v1221, %v1711
  %v1713 = vpop.f32.mrb[0].mxu0
  %v1714 = vadd.f32 %v1225, %v1713
  %v1715 = vpop.f32.mrb[0].mxu0
  %v1716 = vpop.f32.mrb[0].mxu0
  %1717 = vdwg.mxu0
  %v1718 = vxor.u32 %v1589, 2147483648
  %v1719 = vxor.u32 %v1591, 2147483648
  %v1720 = vxor.u32 %v1630, 2147483648
  %v1721 = vxor.u32 %v1632, 2147483648
  %v1722 = vxor.u32 %v1671, 2147483648
  %v1723 = vxor.u32 %v1673, 2147483648
  %v1724 = vxor.u32 %v1712, 2147483648
  %v1725 = vxor.u32 %v1714, 2147483648
  %v1726 = vmul.f32 %v1718, 1.442695
  %v1727 = vpow.pop %v1726
  %v1728 = vmul.f32 %v1719, 1.442695
  %v1729 = vpow.pop %v1728
  %v1730 = vmul.f32 %v1720, 1.442695
  %v1731 = vpow.pop %v1730
  %v1732 = vmul.f32 %v1721, 1.442695
  %v1733 = vpow.pop %v1732
  %v1734 = vmul.f32 %v1722, 1.442695
  %v1735 = vpow.pop %v1734
  %v1736 = vmul.f32 %v1723, 1.442695
  %v1737 = vpow.pop %v1736
  %v1738 = vmul.f32 %v1724, 1.442695
  %v1739 = vpow.pop %v1738
  %v1740 = vmul.f32 %v1725, 1.442695
  %v1741 = vpow.pop %v1740
  %v1742 = vadd.f32 %v1727, 1.0
  %v1743 = vadd.f32 %v1729, 1.0
  %v1744 = vadd.f32 %v1731, 1.0
  %v1745 = vadd.f32 %v1733, 1.0
  %v1746 = vadd.f32 %v1735, 1.0
  %v1747 = vadd.f32 %v1737, 1.0
  %v1748 = vadd.f32 %v1739, 1.0
  %v1749 = vadd.f32 %v1741, 1.0
  %v1750 = vrcp.pop %v1742
  %v1751 = vmul.f32 1.0, %v1750
  %v1752 = vrcp.pop %v1743
  %v1753 = vmul.f32 1.0, %v1752
  %v1754 = vrcp.pop %v1744
  %v1755 = vmul.f32 1.0, %v1754
  %v1756 = vrcp.pop %v1745
  %v1757 = vmul.f32 1.0, %v1756
  %v1758 = vrcp.pop %v1746
  %v1759 = vmul.f32 1.0, %v1758
  %v1760 = vrcp.pop %v1747
  %v1761 = vmul.f32 1.0, %v1760
  %v1762 = vrcp.pop %v1748
  %v1763 = vmul.f32 1.0, %v1762
  %v1764 = vrcp.pop %v1749
  %v1765 = vmul.f32 1.0, %v1764
  %1766 = vst [vmem:[%s14] sm:$0xff] %v1751
  %1767 = vst [vmem:[%s14 + $0x8] sm:$0xff] %v1753
  %1768 = vst [vmem:[%s14 + $0x10] sm:$0xff] %v1755
  %1769 = vst [vmem:[%s14 + $0x18] sm:$0xff] %v1757
  %1770 = vst [vmem:[%s14 + $0x20] sm:$0xff] %v1759
  %1771 = vst [vmem:[%s14 + $0x28] sm:$0xff] %v1761
  %1772 = vst [vmem:[%s14 + $0x30] sm:$0xff] %v1763
  %1773 = vst [vmem:[%s14 + $0x38] sm:$0xff] %v1765
  // Predicated region
  $region58: #{forward.1} parent=0 // pred_check
    _
  $region59: #{forward.1} parent=0 // pred_check_branch
    %1775 = sbr.rel (0) target = $region61
  $region60: #{forward.1} parent=0 // pred_region
    _
  $region61: #{forward.1} parent=0 // pred_fallthru
    _
  // Predicated region
  $region62: #{forward.1} parent=0 // pred_check
    _
  $region63: #{forward.1} parent=0 // pred_check_branch
    %1777 = sbr.rel (0) target = $region65
  $region64: #{forward.1} parent=0 // pred_region
    _
  $region65: #{forward.1} parent=0 // pred_fallthru
    _
  // Predicated region
  $region66: #{forward.1} parent=0 // pred_check
    _
  $region67: #{forward.1} parent=0 // pred_check_branch
    %1779 = sbr.rel (0) target = $region69
  $region68: #{forward.1} parent=0 // pred_region
    _
  $region69: #{forward.1} parent=0 // pred_fallthru
    _
  // Predicated region
  $region70: #{forward.1} parent=0 // pred_check
    _
  $region71: #{forward.1} parent=0 // pred_check_branch
    %1781 = sbr.rel (0) target = $region73
  $region72: #{forward.1} parent=0 // pred_region
    _
  $region73: #{forward.1} parent=0 // pred_fallthru
    _
  // Predicated region
  $region74: #{forward.1} parent=0 // pred_check
    _
  $region75: #{forward.1} parent=0 // pred_check_branch
    %1783 = sbr.rel (0) target = $region77
  $region76: #{forward.1} parent=0 // pred_region
    _
  $region77: #{forward.1} parent=0 // pred_fallthru
    _
  // Predicated region
  $region78: #{forward.1} parent=0 // pred_check
    _
  $region79: #{forward.1} parent=0 // pred_check_branch
    %1785 = sbr.rel (0) target = $region81
  $region80: #{forward.1} parent=0 // pred_region
    _
  $region81: #{forward.1} parent=0 // pred_fallthru
    _

</llo_original>
